<compile_context>
chip_gen: v5e
topology: v5e:2x2
jax: 0.10.0
libtpu: 0.0.40
codegen_flags: <defaults>
</compile_context>

<pallas_src>
import jax
import jax.numpy as jnp
from jax import lax
from jax.experimental import pallas as pl
from jax.experimental.pallas import tpu as pltpu


OUT_DIM = 30     # true embedding width
OUT_PAD = 128    # lane-dense padded output width
TB_MAX = 256     # batch-tile rows per grid step (multiple of 8); tiny VMEM now
                 # that pooling happens in the backbone: tile = tb*512*2B (bf16)

LAYER_CFG = [(64, 2, 1), (128, 2, 2), (256, 2, 2), (512, 2, 2)]


# ----------------------------------------------------------------------------
# Pallas kernel: fused 3-layer MLP head with PReLU, shared across 2 modalities
# ----------------------------------------------------------------------------
def head_kernel(slopes_ref, x_ref, w1_ref, b1_ref, w2_ref, b2_ref,
                w3_ref, b3_ref, out_ref):
    m = pl.program_id(0)                      # modality index (grid axis 0)
    x = x_ref[0]                              # [tb, 512] bf16 pooled features

    h = jnp.dot(x, w1_ref[0], preferred_element_type=jnp.float32) + b1_ref[0]
    h = jnp.where(h >= 0.0, h, slopes_ref[m, 0] * h)          # PReLU 1

    h = jnp.dot(h.astype(w2_ref.dtype), w2_ref[0],
                preferred_element_type=jnp.float32) + b2_ref[0]
    h = jnp.where(h >= 0.0, h, slopes_ref[m, 1] * h)          # PReLU 2

    # w3/b3 zero-padded to 128 lanes -> unmasked lane-dense store.
    out_ref[0] = (jnp.dot(h.astype(w3_ref.dtype), w3_ref[0],
                          preferred_element_type=jnp.float32) + b3_ref[0])


def intermodal_head(pooled, fcs):
    """pooled: [M, Bt, 512] f32 pooled features (M modalities stacked).
    fcs: list of M fc-param dicts. Returns [M, Bt, 30] f32."""
    M, Bt, C = pooled.shape
    assert C == 512 and M == len(fcs)

    x = pooled.astype(jnp.bfloat16)

    w1 = jnp.stack([f["w1"] for f in fcs]).astype(jnp.bfloat16)   # [M,512,256]
    b1 = jnp.stack([f["b1"] for f in fcs])                        # [M,1,256] f32
    w2 = jnp.stack([f["w2"] for f in fcs]).astype(jnp.bfloat16)   # [M,256,256]
    b2 = jnp.stack([f["b2"] for f in fcs])                        # [M,1,256] f32
    w3 = jnp.zeros((M, 256, OUT_PAD), jnp.bfloat16).at[:, :, :OUT_DIM].set(
        jnp.stack([f["w3"] for f in fcs]).astype(jnp.bfloat16))   # lane-padded
    b3 = jnp.zeros((M, 1, OUT_PAD), jnp.float32).at[:, :, :OUT_DIM].set(
        jnp.stack([f["b3"] for f in fcs]))
    slopes = jnp.stack([jnp.concatenate([f["a1"], f["a2"]]) for f in fcs])  # [M,2]

    tb = Bt if Bt <= TB_MAX else TB_MAX
    grid = (M, pl.cdiv(Bt, tb))

    def wspec(shape):
        # weight/bias blocks: invariant along the batch axis, indexed by modality
        return pl.BlockSpec((1,) + shape,
                            lambda m, i, _n=len(shape): (m,) + (0,) * _n)

    smem = pl.BlockSpec(memory_space=pltpu.MemorySpace.SMEM)

    flops = 2 * M * Bt * (512 * 256 + 256 * 256 + 256 * OUT_PAD)
    bytes_accessed = (2 * M * Bt * 512                                   # x (bf16)
                      + 4 * M * Bt * OUT_PAD                             # out (f32)
                      + 2 * M * (512 * 256 + 256 * 256 + 256 * OUT_PAD)  # w (bf16)
                      + 4 * M * (256 + 256 + OUT_PAD + 2))               # b, slopes

    out = pl.pallas_call(
        head_kernel,
        out_shape=jax.ShapeDtypeStruct((M, Bt, OUT_PAD), jnp.float32),
        grid=grid,
        in_specs=[
            smem,                                              # PReLU slopes [M,2]
            pl.BlockSpec((1, tb, C), lambda m, i: (m, i, 0)),  # pooled feats (bf16)
            wspec((512, 256)), wspec((1, 256)),                # w1, b1
            wspec((256, 256)), wspec((1, 256)),                # w2, b2
            wspec((256, OUT_PAD)), wspec((1, OUT_PAD)),        # w3, b3 (padded)
        ],
        out_specs=pl.BlockSpec((1, tb, OUT_PAD), lambda m, i: (m, i, 0)),
        compiler_params=pltpu.CompilerParams(
            dimension_semantics=("parallel", "parallel"),
            vmem_limit_bytes=32 * 1024 * 1024),
        cost_estimate=pl.CostEstimate(
            flops=flops, transcendentals=0, bytes_accessed=bytes_accessed),
    )(slopes, x, w1, b1, w2, b2, w3, b3)

    return out[:, :, :OUT_DIM]


# ----------------------------------------------------------------------------
# ResNet18 backbone (eval-mode BN), plain JAX, NHWC, bf16 convs / f32 accumulate
# ----------------------------------------------------------------------------
def conv2d(x, w, stride, pad):
    return lax.conv_general_dilated(
        x.astype(jnp.bfloat16), w.astype(jnp.bfloat16),
        window_strides=(stride, stride), padding=pad,
        dimension_numbers=("NHWC", "HWIO", "NHWC"),
        preferred_element_type=jnp.float32)


def bn(x, gamma, beta, mean, var, eps=1e-5):
    # channels-last: 1-D params broadcast over the trailing C axis
    return gamma * (x - mean) / jnp.sqrt(var + eps) + beta


def maxpool_3x3_s2(x):
    return lax.reduce_window(
        x, -jnp.inf, lax.max,
        window_dimensions=(1, 3, 3, 1), window_strides=(1, 2, 2, 1),
        padding=[(0, 0), (1, 1), (1, 1), (0, 0)])


def _conv_w(key, out_c, in_c, k):
    # He-style init (like PyTorch's kaiming default for resnet convs), HWIO.
    fan_in = in_c * k * k
    std = (2.0 / fan_in) ** 0.5
    return (std * jax.random.normal(key, (k, k, in_c, out_c))).astype(jnp.float32)


def _bn_p(c):
    # PyTorch BN default init (eval mode): weight=1, bias=0, mean=0, var=1
    return dict(gamma=jnp.ones((c,), jnp.float32), beta=jnp.zeros((c,), jnp.float32),
                mean=jnp.zeros((c,), jnp.float32), var=jnp.ones((c,), jnp.float32))


def init_resnet18(key):
    keys = iter(jax.random.split(key, 64))
    p = {"conv1": _conv_w(next(keys), 64, 3, 7), "bn1": _bn_p(64), "layers": []}
    in_c = 64
    for out_c, n_blocks, first_stride in LAYER_CFG:
        blocks = []
        for i in range(n_blocks):
            s = first_stride if i == 0 else 1
            blk = dict(conv1=_conv_w(next(keys), out_c, in_c, 3), bn1=_bn_p(out_c),
                       conv2=_conv_w(next(keys), out_c, out_c, 3), bn2=_bn_p(out_c))
            if s != 1 or in_c != out_c:
                blk["down_conv"] = _conv_w(next(keys), out_c, in_c, 1)
                blk["down_bn"] = _bn_p(out_c)
            blocks.append(blk)
            in_c = out_c
        p["layers"].append(blocks)
    return p


def basic_block(blk, x, stride):
    h = conv2d(x, blk["conv1"], stride, [(1, 1), (1, 1)])
    h = jax.nn.relu(bn(h, **blk["bn1"]))
    h = conv2d(h, blk["conv2"], 1, [(1, 1), (1, 1)])
    h = bn(h, **blk["bn2"])
    if "down_conv" in blk:
        sc = bn(conv2d(x, blk["down_conv"], stride, [(0, 0), (0, 0)]), **blk["down_bn"])
    else:
        sc = x
    return jax.nn.relu(h + sc)


def resnet18_pooled(p, x):
    """x: [B, H, W, 3] NHWC -> pooled features [B, 512] f32."""
    h = conv2d(x, p["conv1"], 2, [(3, 3), (3, 3)])
    h = jax.nn.relu(bn(h, **p["bn1"]))
    h = maxpool_3x3_s2(h)
    for (out_c, n_blocks, first_stride), blocks in zip(LAYER_CFG, p["layers"]):
        for i, blk in enumerate(blocks):
            h = basic_block(blk, h, first_stride if i == 0 else 1)
    # Global average pool done here (XLA fuses it into the last block epilogue),
    # so the Pallas head only reads [B, 512] instead of [B, S, 512].
    return jnp.mean(h, axis=(1, 2))


# ----------------------------------------------------------------------------
# FC head params (PyTorch Linear default-style deterministic init; PReLU=0.25)
# ----------------------------------------------------------------------------
def init_fc(key):
    k1, k2, k3, k4, k5, k6 = jax.random.split(key, 6)

    def lin(kw, kb, fan_in, fan_out):
        bound = 1.0 / jnp.sqrt(fan_in)
        w = jax.random.uniform(kw, (fan_in, fan_out), jnp.float32, -bound, bound)
        b = jax.random.uniform(kb, (1, fan_out), jnp.float32, -bound, bound)
        return w, b

    w1, b1 = lin(k1, k2, 512, 256)
    w2, b2 = lin(k3, k4, 256, 256)
    w3, b3 = lin(k5, k6, 256, OUT_DIM)
    a1 = jnp.full((1,), 0.25, jnp.float32)   # PReLU default
    a2 = jnp.full((1,), 0.25, jnp.float32)
    return dict(w1=w1, b1=b1, w2=w2, b2=b2, w3=w3, b3=b3, a1=a1, a2=a2)


def init_embedding_net(key):
    k_bb, k_fc = jax.random.split(key)
    return {"convnet": init_resnet18(k_bb), "fc": init_fc(k_fc)}


# ----------------------------------------------------------------------------
# EmbeddingNet + IntermodalTripletNet forward
# ----------------------------------------------------------------------------
def get_modality_embedding(modality_params, x_nchw):
    """Single-modality embedding (get_modOne_embedding / get_modTwo_embedding)."""
    pooled = resnet18_pooled(modality_params["convnet"],
                             jnp.transpose(x_nchw, (0, 2, 3, 1)))
    return intermodal_head(pooled[None], [modality_params["fc"]])[0]


def _intermodal_triplet_forward(params, a_v, p_t, n_t, a_t, p_v, n_v):
    """Matches IntermodalTripletNet.forward: 6 inputs -> 6 embeddings."""
    B = a_v.shape[0]
    # Each modality's 3 inputs batched -> ONE backbone pass per modality.
    x1 = jnp.transpose(jnp.concatenate([a_v, p_v, n_v], axis=0), (0, 2, 3, 1))
    x2 = jnp.transpose(jnp.concatenate([a_t, p_t, n_t], axis=0), (0, 2, 3, 1))
    pooled1 = resnet18_pooled(params["modality_one"]["convnet"], x1)   # [3B, 512]
    pooled2 = resnet18_pooled(params["modality_two"]["convnet"], x2)   # [3B, 512]
    # Both modality heads fused into ONE pallas_call (modality = grid axis 0).
    emb = intermodal_head(jnp.stack([pooled1, pooled2]),
                          [params["modality_one"]["fc"],
                           params["modality_two"]["fc"]])              # [2, 3B, 30]
    e1, e2 = emb[0], emb[1]
    out_anch1, out_pos1, out_neg1 = e1[:B], e1[B:2 * B], e1[2 * B:]
    out_anch2, out_pos2, out_neg2 = e2[:B], e2[B:2 * B], e2[2 * B:]
    return (out_anch1, out_pos2, out_neg2, out_anch2, out_pos1, out_neg1)


intermodal_triplet_forward = jax.jit(_intermodal_triplet_forward)


def embedding_head_ref(pooled, fc):
    """Pure-f32 reference for the MLP head on pooled features [B, 512]."""
    def prelu(h, a):
        return jnp.where(h >= 0.0, h, a[0] * h)
    h = prelu(pooled @ fc["w1"] + fc["b1"], fc["a1"])
    h = prelu(h @ fc["w2"] + fc["b2"], fc["a2"])
    return h @ fc["w3"] + fc["b3"]


if __name__ == "__main__":
    key = jax.random.PRNGKey(0)
    k_in, k_m1, k_m2 = jax.random.split(key, 3)

    # Small triplet inputs: batch=2, 3-channel 64x64 images (NCHW like PyTorch).
    ks = jax.random.split(k_in, 6)
    shape = (2, 3, 64, 64)
    a_v, p_t, n_t, a_t, p_v, n_v = (
        jax.random.normal(k, shape, jnp.float32) for k in ks)

    params = {"modality_one": init_embedding_net(k_m1),
              "modality_two": init_embedding_net(k_m2)}

    outs = intermodal_triplet_forward(params, a_v, p_t, n_t, a_t, p_v, n_v)
    outs = jax.block_until_ready(outs)
    assert len(outs) == 6
    for o in outs:
        assert o.shape == (2, OUT_DIM) and o.dtype == jnp.float32

    # Cross-check the Pallas (bf16-fed) head against a pure-f32 JAX reference on
    # the same pooled features for both modalities.  Tolerance scaled for bf16.
    pooled1 = resnet18_pooled(params["modality_one"]["convnet"],
                              jnp.transpose(jnp.concatenate([a_v, p_v, n_v], 0),
                                            (0, 2, 3, 1)))
    pooled2 = resnet18_pooled(params["modality_two"]["convnet"],
                              jnp.transpose(jnp.concatenate([a_t, p_t, n_t], 0),
                                            (0, 2, 3, 1)))
    got = intermodal_head(jnp.stack([pooled1, pooled2]),
                          [params["modality_one"]["fc"],
                           params["modality_two"]["fc"]])
    ref = jnp.stack([embedding_head_ref(pooled1, params["modality_one"]["fc"]),
                     embedding_head_ref(pooled2, params["modality_two"]["fc"])])
    scale = float(jnp.maximum(jnp.max(jnp.abs(ref)), 1.0))
    assert jnp.allclose(got, ref, atol=3e-2 * scale, rtol=3e-2)

    print("KERNEL_OK")
</pallas_src>

<mosaic_0001>
module attributes {stable_mosaic.version = 11 : i64} {
  func.func @head_kernel(%arg0: i32, %arg1: i32, %arg2: memref<2x2xf32, #tpu.memory_space<smem>>, %arg3: memref<1x6x512xbf16, #tpu.memory_space<vmem>>, %arg4: memref<1x512x256xbf16, #tpu.memory_space<vmem>>, %arg5: memref<1x1x256xf32, #tpu.memory_space<vmem>>, %arg6: memref<1x256x256xbf16, #tpu.memory_space<vmem>>, %arg7: memref<1x1x256xf32, #tpu.memory_space<vmem>>, %arg8: memref<1x256x128xbf16, #tpu.memory_space<vmem>>, %arg9: memref<1x1x128xf32, #tpu.memory_space<vmem>>, %arg10: memref<1x6x128xf32, #tpu.memory_space<vmem>>) attributes {dimension_semantics = [#tpu.dimension_semantics<parallel>, #tpu.dimension_semantics<parallel>], iteration_bounds = array<i64: 2, 1>, scalar_prefetch = 0 : i64, scratch_operands = 0 : i64, tpu.core_type = #tpu.core_type<tc>, window_params = [{transform_indices = @transform_0, window_bounds = array<i64: 2, 2>}, {transform_indices = @transform_1, window_bounds = array<i64: 1, 6, 512>}, {transform_indices = @transform_2, window_bounds = array<i64: 1, 512, 256>}, {transform_indices = @transform_3, window_bounds = array<i64: 1, 1, 256>}, {transform_indices = @transform_4, window_bounds = array<i64: 1, 256, 256>}, {transform_indices = @transform_5, window_bounds = array<i64: 1, 1, 256>}, {transform_indices = @transform_6, window_bounds = array<i64: 1, 256, 128>}, {transform_indices = @transform_7, window_bounds = array<i64: 1, 1, 128>}, {transform_indices = @transform_8, window_bounds = array<i64: 1, 6, 128>}]} {
    %c0 = arith.constant 0 : index
    %c0_0 = arith.constant 0 : index
    %c0_1 = arith.constant 0 : index
    %0 = vector.load %arg3[%c0, %c0_0, %c0_1] : memref<1x6x512xbf16, #tpu.memory_space<vmem>>, vector<1x6x512xbf16>
    %1 = vector.shape_cast %0 : vector<1x6x512xbf16> to vector<6x512xbf16>
    %c0_2 = arith.constant 0 : index
    %c0_3 = arith.constant 0 : index
    %c0_4 = arith.constant 0 : index
    %2 = vector.load %arg4[%c0_2, %c0_3, %c0_4] : memref<1x512x256xbf16, #tpu.memory_space<vmem>>, vector<1x512x256xbf16>
    %3 = vector.shape_cast %2 : vector<1x512x256xbf16> to vector<512x256xbf16>
    %cst = arith.constant dense<0.000000e+00> : vector<6x256xf32>
    %4 = tpu.matmul %1, %3, %cst {dimension_numbers = #tpu.dot_dimension_numbers<[1], [0], [0], [1], [0, 0, 1, 1], [], []>} : vector<6x512xbf16>, vector<512x256xbf16>, vector<6x256xf32> -> vector<6x256xf32>
    %c0_5 = arith.constant 0 : index
    %c0_6 = arith.constant 0 : index
    %c0_7 = arith.constant 0 : index
    %5 = vector.load %arg5[%c0_5, %c0_6, %c0_7] : memref<1x1x256xf32, #tpu.memory_space<vmem>>, vector<1x1x256xf32>
    %6 = vector.shape_cast %5 : vector<1x1x256xf32> to vector<1x256xf32>
    %7 = vector.broadcast %6 : vector<1x256xf32> to vector<6x256xf32>
    %8 = arith.addf %4, %7 : vector<6x256xf32>
    %cst_8 = arith.constant 0.000000e+00 : f32
    %9 = vector.broadcast %cst_8 : f32 to vector<6x256xf32>
    %10 = arith.cmpf oge, %8, %9 : vector<6x256xf32>
    %11 = arith.index_cast %arg0 : i32 to index
    %c0_9 = arith.constant 0 : index
    %12 = memref.load %arg2[%11, %c0_9] : memref<2x2xf32, #tpu.memory_space<smem>>
    %13 = vector.broadcast %12 : f32 to vector<6x256xf32>
    %14 = arith.mulf %13, %8 : vector<6x256xf32>
    %15 = arith.select %10, %8, %14 : vector<6x256xi1>, vector<6x256xf32>
    %16 = arith.truncf %15 : vector<6x256xf32> to vector<6x256xbf16>
    %c0_10 = arith.constant 0 : index
    %c0_11 = arith.constant 0 : index
    %c0_12 = arith.constant 0 : index
    %17 = vector.load %arg6[%c0_10, %c0_11, %c0_12] : memref<1x256x256xbf16, #tpu.memory_space<vmem>>, vector<1x256x256xbf16>
    %18 = vector.shape_cast %17 : vector<1x256x256xbf16> to vector<256x256xbf16>
    %cst_13 = arith.constant dense<0.000000e+00> : vector<6x256xf32>
    %19 = tpu.matmul %16, %18, %cst_13 {dimension_numbers = #tpu.dot_dimension_numbers<[1], [0], [0], [1], [0, 0, 1, 1], [], []>} : vector<6x256xbf16>, vector<256x256xbf16>, vector<6x256xf32> -> vector<6x256xf32>
    %c0_14 = arith.constant 0 : index
    %c0_15 = arith.constant 0 : index
    %c0_16 = arith.constant 0 : index
    %20 = vector.load %arg7[%c0_14, %c0_15, %c0_16] : memref<1x1x256xf32, #tpu.memory_space<vmem>>, vector<1x1x256xf32>
    %21 = vector.shape_cast %20 : vector<1x1x256xf32> to vector<1x256xf32>
    %22 = vector.broadcast %21 : vector<1x256xf32> to vector<6x256xf32>
    %23 = arith.addf %19, %22 : vector<6x256xf32>
    %cst_17 = arith.constant 0.000000e+00 : f32
    %24 = vector.broadcast %cst_17 : f32 to vector<6x256xf32>
    %25 = arith.cmpf oge, %23, %24 : vector<6x256xf32>
    %26 = arith.index_cast %arg0 : i32 to index
    %c1 = arith.constant 1 : index
    %27 = memref.load %arg2[%26, %c1] : memref<2x2xf32, #tpu.memory_space<smem>>
    %28 = vector.broadcast %27 : f32 to vector<6x256xf32>
    %29 = arith.mulf %28, %23 : vector<6x256xf32>
    %30 = arith.select %25, %23, %29 : vector<6x256xi1>, vector<6x256xf32>
    %31 = arith.truncf %30 : vector<6x256xf32> to vector<6x256xbf16>
    %c0_18 = arith.constant 0 : index
    %c0_19 = arith.constant 0 : index
    %c0_20 = arith.constant 0 : index
    %32 = vector.load %arg8[%c0_18, %c0_19, %c0_20] : memref<1x256x128xbf16, #tpu.memory_space<vmem>>, vector<1x256x128xbf16>
    %33 = vector.shape_cast %32 : vector<1x256x128xbf16> to vector<256x128xbf16>
    %cst_21 = arith.constant dense<0.000000e+00> : vector<6x128xf32>
    %34 = tpu.matmul %31, %33, %cst_21 {dimension_numbers = #tpu.dot_dimension_numbers<[1], [0], [0], [1], [0, 0, 1, 1], [], []>} : vector<6x256xbf16>, vector<256x128xbf16>, vector<6x128xf32> -> vector<6x128xf32>
    %c0_22 = arith.constant 0 : index
    %c0_23 = arith.constant 0 : index
    %c0_24 = arith.constant 0 : index
    %35 = vector.load %arg9[%c0_22, %c0_23, %c0_24] : memref<1x1x128xf32, #tpu.memory_space<vmem>>, vector<1x1x128xf32>
    %36 = vector.shape_cast %35 : vector<1x1x128xf32> to vector<1x128xf32>
    %37 = vector.broadcast %36 : vector<1x128xf32> to vector<6x128xf32>
    %38 = arith.addf %34, %37 : vector<6x128xf32>
    %c0_25 = arith.constant 0 : index
    %c0_26 = arith.constant 0 : index
    %c0_27 = arith.constant 0 : index
    %39 = vector.load %arg10[%c0_25, %c0_26, %c0_27] : memref<1x6x128xf32, #tpu.memory_space<vmem>>, vector<1x6x128xf32>
    %40 = vector.shape_cast %39 : vector<1x6x128xf32> to vector<6x128xf32>
    %41 = vector.shape_cast %38 : vector<6x128xf32> to vector<1x6x128xf32>
    tpu.vector_store %arg10[%c0_25, %c0_26, %c0_27], %41 {strides = array<i32>} : memref<1x6x128xf32, #tpu.memory_space<vmem>>, vector<1x6x128xf32>,
    return
  }
  func.func @transform_0(%arg0: i32, %arg1: i32) -> (i32, i32) {
    %c0_i32 = arith.constant 0 : i32
    %c0_i32_0 = arith.constant 0 : i32
    %c0_i32_1 = arith.constant 0 : i32
    return %c0_i32, %c0_i32_0 : i32, i32
  }
  func.func @transform_1(%arg0: i32, %arg1: i32) -> (i32, i32, i32) {
    %c0_i32 = arith.constant 0 : i32
    %c0_i32_0 = arith.constant 0 : i32
    return %arg0, %arg1, %c0_i32 : i32, i32, i32
  }
  func.func @transform_2(%arg0: i32, %arg1: i32) -> (i32, i32, i32) {
    %c0_i32 = arith.constant 0 : i32
    %c0_i32_0 = arith.constant 0 : i32
    %c0_i32_1 = arith.constant 0 : i32
    return %arg0, %c0_i32, %c0_i32_0 : i32, i32, i32
  }
  func.func @transform_3(%arg0: i32, %arg1: i32) -> (i32, i32, i32) {
    %c0_i32 = arith.constant 0 : i32
    %c0_i32_0 = arith.constant 0 : i32
    %c0_i32_1 = arith.constant 0 : i32
    return %arg0, %c0_i32, %c0_i32_0 : i32, i32, i32
  }
  func.func @transform_4(%arg0: i32, %arg1: i32) -> (i32, i32, i32) {
    %c0_i32 = arith.constant 0 : i32
    %c0_i32_0 = arith.constant 0 : i32
    %c0_i32_1 = arith.constant 0 : i32
    return %arg0, %c0_i32, %c0_i32_0 : i32, i32, i32
  }
  func.func @transform_5(%arg0: i32, %arg1: i32) -> (i32, i32, i32) {
    %c0_i32 = arith.constant 0 : i32
    %c0_i32_0 = arith.constant 0 : i32
    %c0_i32_1 = arith.constant 0 : i32
    return %arg0, %c0_i32, %c0_i32_0 : i32, i32, i32
  }
  func.func @transform_6(%arg0: i32, %arg1: i32) -> (i32, i32, i32) {
    %c0_i32 = arith.constant 0 : i32
    %c0_i32_0 = arith.constant 0 : i32
    %c0_i32_1 = arith.constant 0 : i32
    return %arg0, %c0_i32, %c0_i32_0 : i32, i32, i32
  }
  func.func @transform_7(%arg0: i32, %arg1: i32) -> (i32, i32, i32) {
    %c0_i32 = arith.constant 0 : i32
    %c0_i32_0 = arith.constant 0 : i32
    %c0_i32_1 = arith.constant 0 : i32
    return %arg0, %c0_i32, %c0_i32_0 : i32, i32, i32
  }
  func.func @transform_8(%arg0: i32, %arg1: i32) -> (i32, i32, i32) {
    %c0_i32 = arith.constant 0 : i32
    %c0_i32_0 = arith.constant 0 : i32
    return %arg0, %arg1, %c0_i32 : i32, i32, i32
  }
}

</mosaic_0001>

<llo_original>
// kernel: reverse
$region0: #{reverse}
  #allocation0 [shape = 's32[1]{0}', space=sflag, size = 0x4, scoped, tag = 'scoped memory for reverse']
  %s0 = inlined_call_operand.vmem [shape: bf16[3,3,512,512], index: 0, kind: input, shape index: {}]
  %s1 = inlined_call_operand.vmem [shape: bf16[3,3,512,512], index: 1, kind: output, shape index: {}]
  loop: start=0, step=1, limit=28
  $region2: #{reverse} parent=0 // loop_pre_header
    _
  $region3: #{reverse} parent=0 // loop_header
    %s3 = sphi 0, %s7
    %p4 = scmp.ge.s32.totalorder %s3, 28
    %s18 = sphi 0, %s76
    %s19 = sphi 0, %s72
    %s20 = sphi 0, %s68
    %s21 = sphi 0, %s64
    %s22 = sphi 0, %s18
    %s23 = sphi 0, %s19
    %s24 = sphi 0, %s20
    %s25 = sphi 0, %s21
    %s26 = sphi 0, %s22
    %s27 = sphi 0, %s23
    %s28 = sphi 0, %s24
    %s29 = sphi 0, %s25
    %s30 = sphi 0, %s26
    %s31 = sphi 0, %s27
    %s32 = sphi 0, %s28
    %s33 = sphi 0, %s29
    %s34 = sphi 0, %s30
    %s35 = sphi 0, %s31
    %s36 = sphi 0, %s32
    %s37 = sphi 0, %s33
    %s38 = sphi 0, %s34
    %s39 = sphi 0, %s35
    %s40 = sphi 0, %s36
    %s41 = sphi 0, %s37
    %s42 = sphi 0, %s38
    %s43 = sphi 0, %s39
    %s44 = sphi 0, %s40
    %s45 = sphi 0, %s41
    %s46 = sphi 0, %s42
    %s47 = sphi 0, %s43
    %s48 = sphi 0, %s44
    %s49 = sphi 0, %s45
    %s50 = sphi 0, %s46
    %s51 = sphi 0, %s47
    %s52 = sphi 0, %s48
    %s53 = sphi 0, %s49
    %s54 = sphi 0, %s50
    %s55 = sphi 0, %s51
    %s56 = sphi 0, %s52
    %s57 = sphi 0, %s53
    %s58 = sphi 0, %s54
    %s59 = sphi 0, %s55
    %s60 = sphi 0, %s56
    %s61 = sphi 0, %s57
  $region4: #{reverse} parent=0 // loop_header_branch
    %6 = sbr.rel (%p4) target = $region8
  $region5: #{reverse} parent=0 // loop_body
    %s8 = ssub.s32 %s3, 1
    %s9 = ssub.s32 %s3, 2
    %s10 = ssub.s32 %s3, 3
    %s11 = ssub.s32 %s3, 4
    %s12 = ssub.s32 %s3, 5
    %s13 = ssub.s32 %s3, 6
    %s14 = ssub.s32 %s3, 7
    %s15 = ssub.s32 %s3, 8
    %s16 = ssub.s32 %s3, 9
    %s17 = ssub.s32 %s3, 10
    %s62 = sadd.s32 1, %s21
    %p63 = scmp.ge.s32.totalorder %s62, 1
    %s64 = scalar_select %p63, 0, %s62
    %s65 = sadd.s32 1, %s20
    %s66 = scalar_select %p63, %s65, %s20
    %p67 = scmp.ge.s32.totalorder %s66, 2
    %s68 = scalar_select %p67, 0, %s66
    %s69 = sadd.s32 1, %s19
    %s70 = scalar_select %p67, %s69, %s19
    %p71 = scmp.ge.s32.totalorder %s70, 3
    %s72 = scalar_select %p71, 0, %s70
    %s73 = sadd.s32 1, %s18
    %s74 = scalar_select %p71, %s73, %s18
    %p75 = scmp.ge.s32.totalorder %s74, 3
    %s76 = scalar_select %p75, 0, %s74
    %p77 = scmp.le.s32.totalorder 5, %s3
    %p78 = scmp.lt.s32.totalorder %s3, 23
    %p79 = pnand %p77, %p78
    %p80 = pneg %p79
    // Predicated region
    $region9: #{reverse} parent=5 // pred_check
      _
    $region10: #{reverse} parent=5 // pred_check_branch
      %82 = sbr.rel (%p79) target = $region12
    $region11: #{reverse} parent=5 // pred_region
      %s83 = ssub.s32 %s3, 5
    $region12: #{reverse} parent=5 // pred_fallthru
      _
    %p84 = scmp.lt.s32.totalorder %s3, 18
    // Predicated region
    $region13: #{reverse} parent=5 // pred_check
      %p85 = pneg %p84
    $region14: #{reverse} parent=5 // pred_check_branch
      %87 = sbr.rel (%p85) target = $region16
    $region15: #{reverse} parent=5 // pred_region
      %s88 = ssub.s32 2, %s18
      %s89 = ssub.s32 2, %s19
      %s90 = smul.u32 32, %s20
      %s91 = smul.u32 4, %s21
      %p92 = scmp.lt.s32.totalorder %s88, 2
      %s93 = scalar_select %p92, %s88, 2
      %p94 = scmp.lt.s32.totalorder %s89, 2
      %s95 = scalar_select %p94, %s89, 2
      %p96 = scmp.lt.s32.totalorder %s90, 63
      %s97 = scalar_select %p96, %s90, 63
      %p98 = scmp.lt.s32.totalorder %s91, 3
      %s99 = scalar_select %p98, %s91, 3
      %s100 = smul.addr %s97, 4
      %s101 = sadd.s32 %s99, %s100
      %s102 = smul.addr %s95, 256
      %s103 = sadd.s32 %s101, %s102
      %s104 = smul.addr %s93, 768
      %s105 = sadd.s32 %s103, %s104
      %s106 = smul.addr %s105, 4
      %s107 = scalar_lea.vmem %s0, %s106
      %s108 = ssub.s32 2, %s18
      %s109 = ssub.s32 2, %s19
      %s110 = smul.u32 32, %s20
      %s111 = smul.u32 4, %s21
    $region16: #{reverse} parent=5 // pred_fallthru
      _
    %p112 = scmp.le.s32.totalorder 5, %s3
    %p113 = scmp.lt.s32.totalorder %s3, 23
    %p114 = pnand %p112, %p113
    %p115 = pneg %p114
    // Predicated region
    $region17: #{reverse} parent=5 // pred_check
      _
    $region18: #{reverse} parent=5 // pred_check_branch
      %117 = sbr.rel (%p114) target = $region20
    $region19: #{reverse} parent=5 // pred_region
      %s118 = ssub.s32 %s3, 5
      %s119 = ssub.s32 2, %s38
      %s120 = ssub.s32 2, %s39
      %s121 = smul.u32 32, %s40
      %s122 = smul.u32 4, %s41
      %p123 = scmp.lt.s32.totalorder %s119, 2
      %s124 = scalar_select %p123, %s119, 2
      %p125 = scmp.lt.s32.totalorder %s120, 2
      %s126 = scalar_select %p125, %s120, 2
      %p127 = scmp.lt.s32.totalorder %s121, 63
      %s128 = scalar_select %p127, %s121, 63
      %p129 = scmp.lt.s32.totalorder %s122, 3
      %s130 = scalar_select %p129, %s122, 3
      %s131 = smul.addr %s128, 4
      %s132 = sadd.s32 %s130, %s131
      %s133 = smul.addr %s126, 256
      %s134 = sadd.s32 %s132, %s133
      %s135 = smul.addr %s124, 768
      %s136 = sadd.s32 %s134, %s135
      %s137 = smul.addr %s136, 4
      %s138 = scalar_lea.vmem %s0, %s137
      %s139 = smul.u32 32, %s40
      %s140 = smul.u32 4, %s41
      %p141 = scmp.lt.s32.totalorder %s38, 2
      %s142 = scalar_select %p141, %s38, 2
      %p143 = scmp.lt.s32.totalorder %s39, 2
      %s144 = scalar_select %p143, %s39, 2
      %p145 = scmp.lt.s32.totalorder %s139, 63
      %s146 = scalar_select %p145, %s139, 63
      %p147 = scmp.lt.s32.totalorder %s140, 3
      %s148 = scalar_select %p147, %s140, 3
      %s149 = smul.addr %s146, 4
      %s150 = sadd.s32 %s148, %s149
      %s151 = smul.addr %s144, 256
      %s152 = sadd.s32 %s150, %s151
      %s153 = smul.addr %s142, 768
      %s154 = sadd.s32 %s152, %s153
      %s155 = smul.addr %s154, 4
      %s156 = scalar_lea.vmem %s1, %s155
      %s157 = smul.u32 32, %s40
      %s158 = smul.u32 4, %s41
      %s159 = ssub.s32 2, %s38
      %s160 = ssub.s32 2, %s39
      %s161 = smul.u32 32, %s40
      %s162 = smul.u32 4, %s41
      %p163 = scmp.lt.s32.totalorder %s159, 2
      %s164 = scalar_select %p163, %s159, 2
      %p165 = scmp.lt.s32.totalorder %s160, 2
      %s166 = scalar_select %p165, %s160, 2
      %p167 = scmp.lt.s32.totalorder %s161, 63
      %s168 = scalar_select %p167, %s161, 63
      %p169 = scmp.lt.s32.totalorder %s162, 3
      %s170 = scalar_select %p169, %s162, 3
      %s171 = smul.addr %s168, 4
      %s172 = sadd.s32 %s170, %s171
      %s173 = smul.addr %s166, 256
      %s174 = sadd.s32 %s172, %s173
      %s175 = smul.addr %s164, 768
      %s176 = sadd.s32 %s174, %s175
      %s177 = smul.addr %s176, 4
      %s178 = scalar_lea.vmem %s0, %s177
      %s179 = ssub.s32 2, %s38
      %s180 = ssub.s32 2, %s39
      %s181 = smul.u32 32, %s40
      %s182 = smul.u32 4, %s41
      %s183 = smul.u32 32, %s40
      %s184 = smul.u32 4, %s41
      %p185 = scmp.lt.s32.totalorder %s38, 2
      %s186 = scalar_select %p185, %s38, 2
      %p187 = scmp.lt.s32.totalorder %s39, 2
      %s188 = scalar_select %p187, %s39, 2
      %p189 = scmp.lt.s32.totalorder %s183, 63
      %s190 = scalar_select %p189, %s183, 63
      %p191 = scmp.lt.s32.totalorder %s184, 3
      %s192 = scalar_select %p191, %s184, 3
      %s193 = smul.addr %s190, 4
      %s194 = sadd.s32 %s192, %s193
      %s195 = smul.addr %s188, 256
      %s196 = sadd.s32 %s194, %s195
      %s197 = smul.addr %s186, 768
      %s198 = sadd.s32 %s196, %s197
      %s199 = smul.addr %s198, 4
      %s200 = scalar_lea.vmem %s1, %s199
      %s201 = smul.u32 32, %s40
      %s202 = smul.u32 4, %s41
      %v203 = vld [vmem:[%s178] sm:$0xf]
      %v204 = vunpack.c.l.bf16 %v203
      %v205 = vunpack.c.h.bf16 %v203
      %s206 = scalar_lea.vmem %s178, 16
      %v207 = vld [vmem:[%s206] sm:$0xf]
      %v208 = vunpack.c.l.bf16 %v207
      %v209 = vunpack.c.h.bf16 %v207
      %s210 = scalar_lea.vmem %s200, 16
      %s211 = scalar_lea.vmem %s178, 32
      %v212 = vld [vmem:[%s211] sm:$0xf]
      %v213 = vunpack.c.l.bf16 %v212
      %v214 = vunpack.c.h.bf16 %v212
      %s215 = scalar_lea.vmem %s200, 32
      %s216 = scalar_lea.vmem %s178, 48
      %v217 = vld [vmem:[%s216] sm:$0xf]
      %v218 = vunpack.c.l.bf16 %v217
      %v219 = vunpack.c.h.bf16 %v217
      %s220 = scalar_lea.vmem %s200, 48
      %s221 = scalar_lea.vmem %s178, 64
      %v222 = vld [vmem:[%s221] sm:$0xf]
      %v223 = vunpack.c.l.bf16 %v222
      %v224 = vunpack.c.h.bf16 %v222
      %s225 = scalar_lea.vmem %s200, 64
      %s226 = scalar_lea.vmem %s178, 80
      %v227 = vld [vmem:[%s226] sm:$0xf]
      %v228 = vunpack.c.l.bf16 %v227
      %v229 = vunpack.c.h.bf16 %v227
      %s230 = scalar_lea.vmem %s200, 80
      %s231 = scalar_lea.vmem %s178, 96
      %v232 = vld [vmem:[%s231] sm:$0xf]
      %v233 = vunpack.c.l.bf16 %v232
      %v234 = vunpack.c.h.bf16 %v232
      %s235 = scalar_lea.vmem %s200, 96
      %s236 = scalar_lea.vmem %s178, 112
      %v237 = vld [vmem:[%s236] sm:$0xf]
      %v238 = vunpack.c.l.bf16 %v237
      %v239 = vunpack.c.h.bf16 %v237
      %s240 = scalar_lea.vmem %s200, 112
      %s241 = scalar_lea.vmem %s178, 128
      %v242 = vld [vmem:[%s241] sm:$0xf]
      %v243 = vunpack.c.l.bf16 %v242
      %v244 = vunpack.c.h.bf16 %v242
      %s245 = scalar_lea.vmem %s200, 128
      %s246 = scalar_lea.vmem %s178, 144
      %v247 = vld [vmem:[%s246] sm:$0xf]
      %v248 = vunpack.c.l.bf16 %v247
      %v249 = vunpack.c.h.bf16 %v247
      %s250 = scalar_lea.vmem %s200, 144
      %s251 = scalar_lea.vmem %s178, 160
      %v252 = vld [vmem:[%s251] sm:$0xf]
      %v253 = vunpack.c.l.bf16 %v252
      %v254 = vunpack.c.h.bf16 %v252
      %s255 = scalar_lea.vmem %s200, 160
      %s256 = scalar_lea.vmem %s178, 176
      %v257 = vld [vmem:[%s256] sm:$0xf]
      %v258 = vunpack.c.l.bf16 %v257
      %v259 = vunpack.c.h.bf16 %v257
      %s260 = scalar_lea.vmem %s200, 176
      %s261 = scalar_lea.vmem %s178, 192
      %v262 = vld [vmem:[%s261] sm:$0xf]
      %v263 = vunpack.c.l.bf16 %v262
      %v264 = vunpack.c.h.bf16 %v262
      %s265 = scalar_lea.vmem %s200, 192
      %s266 = scalar_lea.vmem %s178, 208
      %v267 = vld [vmem:[%s266] sm:$0xf]
      %v268 = vunpack.c.l.bf16 %v267
      %v269 = vunpack.c.h.bf16 %v267
      %s270 = scalar_lea.vmem %s200, 208
      %s271 = scalar_lea.vmem %s178, 224
      %v272 = vld [vmem:[%s271] sm:$0xf]
      %v273 = vunpack.c.l.bf16 %v272
      %v274 = vunpack.c.h.bf16 %v272
      %s275 = scalar_lea.vmem %s200, 224
      %s276 = scalar_lea.vmem %s178, 240
      %v277 = vld [vmem:[%s276] sm:$0xf]
      %v278 = vunpack.c.l.bf16 %v277
      %v279 = vunpack.c.h.bf16 %v277
      %s280 = scalar_lea.vmem %s200, 240
      %s281 = scalar_lea.vmem %s178, 256
      %v282 = vld [vmem:[%s281] sm:$0xf]
      %v283 = vunpack.c.l.bf16 %v282
      %v284 = vunpack.c.h.bf16 %v282
      %s285 = scalar_lea.vmem %s200, 256
      %s286 = scalar_lea.vmem %s178, 272
      %v287 = vld [vmem:[%s286] sm:$0xf]
      %v288 = vunpack.c.l.bf16 %v287
      %v289 = vunpack.c.h.bf16 %v287
      %s290 = scalar_lea.vmem %s200, 272
      %s291 = scalar_lea.vmem %s178, 288
      %v292 = vld [vmem:[%s291] sm:$0xf]
      %v293 = vunpack.c.l.bf16 %v292
      %v294 = vunpack.c.h.bf16 %v292
      %s295 = scalar_lea.vmem %s200, 288
      %s296 = scalar_lea.vmem %s178, 304
      %v297 = vld [vmem:[%s296] sm:$0xf]
      %v298 = vunpack.c.l.bf16 %v297
      %v299 = vunpack.c.h.bf16 %v297
      %s300 = scalar_lea.vmem %s200, 304
      %s301 = scalar_lea.vmem %s178, 320
      %v302 = vld [vmem:[%s301] sm:$0xf]
      %v303 = vunpack.c.l.bf16 %v302
      %v304 = vunpack.c.h.bf16 %v302
      %s305 = scalar_lea.vmem %s200, 320
      %s306 = scalar_lea.vmem %s178, 336
      %v307 = vld [vmem:[%s306] sm:$0xf]
      %v308 = vunpack.c.l.bf16 %v307
      %v309 = vunpack.c.h.bf16 %v307
      %s310 = scalar_lea.vmem %s200, 336
      %s311 = scalar_lea.vmem %s178, 352
      %v312 = vld [vmem:[%s311] sm:$0xf]
      %v313 = vunpack.c.l.bf16 %v312
      %v314 = vunpack.c.h.bf16 %v312
      %s315 = scalar_lea.vmem %s200, 352
      %s316 = scalar_lea.vmem %s178, 368
      %v317 = vld [vmem:[%s316] sm:$0xf]
      %v318 = vunpack.c.l.bf16 %v317
      %v319 = vunpack.c.h.bf16 %v317
      %s320 = scalar_lea.vmem %s200, 368
      %s321 = scalar_lea.vmem %s178, 384
      %v322 = vld [vmem:[%s321] sm:$0xf]
      %v323 = vunpack.c.l.bf16 %v322
      %v324 = vunpack.c.h.bf16 %v322
      %s325 = scalar_lea.vmem %s200, 384
      %s326 = scalar_lea.vmem %s178, 400
      %v327 = vld [vmem:[%s326] sm:$0xf]
      %v328 = vunpack.c.l.bf16 %v327
      %v329 = vunpack.c.h.bf16 %v327
      %s330 = scalar_lea.vmem %s200, 400
      %s331 = scalar_lea.vmem %s178, 416
      %v332 = vld [vmem:[%s331] sm:$0xf]
      %v333 = vunpack.c.l.bf16 %v332
      %v334 = vunpack.c.h.bf16 %v332
      %s335 = scalar_lea.vmem %s200, 416
      %s336 = scalar_lea.vmem %s178, 432
      %v337 = vld [vmem:[%s336] sm:$0xf]
      %v338 = vunpack.c.l.bf16 %v337
      %v339 = vunpack.c.h.bf16 %v337
      %s340 = scalar_lea.vmem %s200, 432
      %s341 = scalar_lea.vmem %s178, 448
      %v342 = vld [vmem:[%s341] sm:$0xf]
      %v343 = vunpack.c.l.bf16 %v342
      %v344 = vunpack.c.h.bf16 %v342
      %s345 = scalar_lea.vmem %s200, 448
      %s346 = scalar_lea.vmem %s178, 464
      %v347 = vld [vmem:[%s346] sm:$0xf]
      %v348 = vunpack.c.l.bf16 %v347
      %v349 = vunpack.c.h.bf16 %v347
      %s350 = scalar_lea.vmem %s200, 464
      %s351 = scalar_lea.vmem %s178, 480
      %v352 = vld [vmem:[%s351] sm:$0xf]
      %v353 = vunpack.c.l.bf16 %v352
      %v354 = vunpack.c.h.bf16 %v352
      %s355 = scalar_lea.vmem %s200, 480
      %s356 = scalar_lea.vmem %s178, 496
      %v357 = vld [vmem:[%s356] sm:$0xf]
      %v358 = vunpack.c.l.bf16 %v357
      %v359 = vunpack.c.h.bf16 %v357
      %s360 = scalar_lea.vmem %s200, 496
      %s361 = scalar_lea.vmem %s178, 4
      %v362 = vld [vmem:[%s361] sm:$0xf]
      %v363 = vunpack.c.l.bf16 %v362
      %v364 = vunpack.c.h.bf16 %v362
      %s365 = scalar_lea.vmem %s200, 4
      %s366 = scalar_lea.vmem %s365, 4294967292
      %v367 = vpack.c.bf16 %v363, %v204
      %368 = vst [vmem:[%s366] sm:$0xff] %v367
      %s369 = scalar_lea.vmem %s178, 20
      %v370 = vld [vmem:[%s369] sm:$0xf]
      %v371 = vunpack.c.l.bf16 %v370
      %v372 = vunpack.c.h.bf16 %v370
      %s373 = scalar_lea.vmem %s200, 20
      %s374 = scalar_lea.vmem %s373, 4294967292
      %v375 = vpack.c.bf16 %v371, %v208
      %376 = vst [vmem:[%s374] sm:$0xff] %v375
      %s377 = scalar_lea.vmem %s178, 36
      %v378 = vld [vmem:[%s377] sm:$0xf]
      %v379 = vunpack.c.l.bf16 %v378
      %v380 = vunpack.c.h.bf16 %v378
      %s381 = scalar_lea.vmem %s200, 36
      %s382 = scalar_lea.vmem %s381, 4294967292
      %v383 = vpack.c.bf16 %v379, %v213
      %384 = vst [vmem:[%s382] sm:$0xff] %v383
      %s385 = scalar_lea.vmem %s178, 52
      %v386 = vld [vmem:[%s385] sm:$0xf]
      %v387 = vunpack.c.l.bf16 %v386
      %v388 = vunpack.c.h.bf16 %v386
      %s389 = scalar_lea.vmem %s200, 52
      %s390 = scalar_lea.vmem %s389, 4294967292
      %v391 = vpack.c.bf16 %v387, %v218
      %392 = vst [vmem:[%s390] sm:$0xff] %v391
      %s393 = scalar_lea.vmem %s178, 68
      %v394 = vld [vmem:[%s393] sm:$0xf]
      %v395 = vunpack.c.l.bf16 %v394
      %v396 = vunpack.c.h.bf16 %v394
      %s397 = scalar_lea.vmem %s200, 68
      %s398 = scalar_lea.vmem %s397, 4294967292
      %v399 = vpack.c.bf16 %v395, %v223
      %400 = vst [vmem:[%s398] sm:$0xff] %v399
      %s401 = scalar_lea.vmem %s178, 84
      %v402 = vld [vmem:[%s401] sm:$0xf]
      %v403 = vunpack.c.l.bf16 %v402
      %v404 = vunpack.c.h.bf16 %v402
      %s405 = scalar_lea.vmem %s200, 84
      %s406 = scalar_lea.vmem %s405, 4294967292
      %v407 = vpack.c.bf16 %v403, %v228
      %408 = vst [vmem:[%s406] sm:$0xff] %v407
      %s409 = scalar_lea.vmem %s178, 100
      %v410 = vld [vmem:[%s409] sm:$0xf]
      %v411 = vunpack.c.l.bf16 %v410
      %v412 = vunpack.c.h.bf16 %v410
      %s413 = scalar_lea.vmem %s200, 100
      %s414 = scalar_lea.vmem %s413, 4294967292
      %v415 = vpack.c.bf16 %v411, %v233
      %416 = vst [vmem:[%s414] sm:$0xff] %v415
      %s417 = scalar_lea.vmem %s178, 116
      %v418 = vld [vmem:[%s417] sm:$0xf]
      %v419 = vunpack.c.l.bf16 %v418
      %v420 = vunpack.c.h.bf16 %v418
      %s421 = scalar_lea.vmem %s200, 116
      %s422 = scalar_lea.vmem %s421, 4294967292
      %v423 = vpack.c.bf16 %v419, %v238
      %424 = vst [vmem:[%s422] sm:$0xff] %v423
      %s425 = scalar_lea.vmem %s178, 132
      %v426 = vld [vmem:[%s425] sm:$0xf]
      %v427 = vunpack.c.l.bf16 %v426
      %v428 = vunpack.c.h.bf16 %v426
      %s429 = scalar_lea.vmem %s200, 132
      %s430 = scalar_lea.vmem %s429, 4294967292
      %v431 = vpack.c.bf16 %v427, %v243
      %432 = vst [vmem:[%s430] sm:$0xff] %v431
      %s433 = scalar_lea.vmem %s178, 148
      %v434 = vld [vmem:[%s433] sm:$0xf]
      %v435 = vunpack.c.l.bf16 %v434
      %v436 = vunpack.c.h.bf16 %v434
      %s437 = scalar_lea.vmem %s200, 148
      %s438 = scalar_lea.vmem %s437, 4294967292
      %v439 = vpack.c.bf16 %v435, %v248
      %440 = vst [vmem:[%s438] sm:$0xff] %v439
      %s441 = scalar_lea.vmem %s178, 164
      %v442 = vld [vmem:[%s441] sm:$0xf]
      %v443 = vunpack.c.l.bf16 %v442
      %v444 = vunpack.c.h.bf16 %v442
      %s445 = scalar_lea.vmem %s200, 164
      %s446 = scalar_lea.vmem %s445, 4294967292
      %v447 = vpack.c.bf16 %v443, %v253
      %448 = vst [vmem:[%s446] sm:$0xff] %v447
      %s449 = scalar_lea.vmem %s178, 180
      %v450 = vld [vmem:[%s449] sm:$0xf]
      %v451 = vunpack.c.l.bf16 %v450
      %v452 = vunpack.c.h.bf16 %v450
      %s453 = scalar_lea.vmem %s200, 180
      %s454 = scalar_lea.vmem %s453, 4294967292
      %v455 = vpack.c.bf16 %v451, %v258
      %456 = vst [vmem:[%s454] sm:$0xff] %v455
      %s457 = scalar_lea.vmem %s178, 196
      %v458 = vld [vmem:[%s457] sm:$0xf]
      %v459 = vunpack.c.l.bf16 %v458
      %v460 = vunpack.c.h.bf16 %v458
      %s461 = scalar_lea.vmem %s200, 196
      %s462 = scalar_lea.vmem %s461, 4294967292
      %v463 = vpack.c.bf16 %v459, %v263
      %464 = vst [vmem:[%s462] sm:$0xff] %v463
      %s465 = scalar_lea.vmem %s178, 212
      %v466 = vld [vmem:[%s465] sm:$0xf]
      %v467 = vunpack.c.l.bf16 %v466
      %v468 = vunpack.c.h.bf16 %v466
      %s469 = scalar_lea.vmem %s200, 212
      %s470 = scalar_lea.vmem %s469, 4294967292
      %v471 = vpack.c.bf16 %v467, %v268
      %472 = vst [vmem:[%s470] sm:$0xff] %v471
      %s473 = scalar_lea.vmem %s178, 228
      %v474 = vld [vmem:[%s473] sm:$0xf]
      %v475 = vunpack.c.l.bf16 %v474
      %v476 = vunpack.c.h.bf16 %v474
      %s477 = scalar_lea.vmem %s200, 228
      %s478 = scalar_lea.vmem %s477, 4294967292
      %v479 = vpack.c.bf16 %v475, %v273
      %480 = vst [vmem:[%s478] sm:$0xff] %v479
      %s481 = scalar_lea.vmem %s178, 244
      %v482 = vld [vmem:[%s481] sm:$0xf]
      %v483 = vunpack.c.l.bf16 %v482
      %v484 = vunpack.c.h.bf16 %v482
      %s485 = scalar_lea.vmem %s200, 244
      %s486 = scalar_lea.vmem %s485, 4294967292
      %v487 = vpack.c.bf16 %v483, %v278
      %488 = vst [vmem:[%s486] sm:$0xff] %v487
      %s489 = scalar_lea.vmem %s178, 260
      %v490 = vld [vmem:[%s489] sm:$0xf]
      %v491 = vunpack.c.l.bf16 %v490
      %v492 = vunpack.c.h.bf16 %v490
      %s493 = scalar_lea.vmem %s200, 260
      %s494 = scalar_lea.vmem %s493, 4294967292
      %v495 = vpack.c.bf16 %v491, %v283
      %496 = vst [vmem:[%s494] sm:$0xff] %v495
      %s497 = scalar_lea.vmem %s178, 276
      %v498 = vld [vmem:[%s497] sm:$0xf]
      %v499 = vunpack.c.l.bf16 %v498
      %v500 = vunpack.c.h.bf16 %v498
      %s501 = scalar_lea.vmem %s200, 276
      %s502 = scalar_lea.vmem %s501, 4294967292
      %v503 = vpack.c.bf16 %v499, %v288
      %504 = vst [vmem:[%s502] sm:$0xff] %v503
      %s505 = scalar_lea.vmem %s178, 292
      %v506 = vld [vmem:[%s505] sm:$0xf]
      %v507 = vunpack.c.l.bf16 %v506
      %v508 = vunpack.c.h.bf16 %v506
      %s509 = scalar_lea.vmem %s200, 292
      %s510 = scalar_lea.vmem %s509, 4294967292
      %v511 = vpack.c.bf16 %v507, %v293
      %512 = vst [vmem:[%s510] sm:$0xff] %v511
      %s513 = scalar_lea.vmem %s178, 308
      %v514 = vld [vmem:[%s513] sm:$0xf]
      %v515 = vunpack.c.l.bf16 %v514
      %v516 = vunpack.c.h.bf16 %v514
      %s517 = scalar_lea.vmem %s200, 308
      %s518 = scalar_lea.vmem %s517, 4294967292
      %v519 = vpack.c.bf16 %v515, %v298
      %520 = vst [vmem:[%s518] sm:$0xff] %v519
      %s521 = scalar_lea.vmem %s178, 324
      %v522 = vld [vmem:[%s521] sm:$0xf]
      %v523 = vunpack.c.l.bf16 %v522
      %v524 = vunpack.c.h.bf16 %v522
      %s525 = scalar_lea.vmem %s200, 324
      %s526 = scalar_lea.vmem %s525, 4294967292
      %v527 = vpack.c.bf16 %v523, %v303
      %528 = vst [vmem:[%s526] sm:$0xff] %v527
      %s529 = scalar_lea.vmem %s178, 340
      %v530 = vld [vmem:[%s529] sm:$0xf]
      %v531 = vunpack.c.l.bf16 %v530
      %v532 = vunpack.c.h.bf16 %v530
      %s533 = scalar_lea.vmem %s200, 340
      %s534 = scalar_lea.vmem %s533, 4294967292
      %v535 = vpack.c.bf16 %v531, %v308
      %536 = vst [vmem:[%s534] sm:$0xff] %v535
      %s537 = scalar_lea.vmem %s178, 356
      %v538 = vld [vmem:[%s537] sm:$0xf]
      %v539 = vunpack.c.l.bf16 %v538
      %v540 = vunpack.c.h.bf16 %v538
      %s541 = scalar_lea.vmem %s200, 356
      %s542 = scalar_lea.vmem %s541, 4294967292
      %v543 = vpack.c.bf16 %v539, %v313
      %544 = vst [vmem:[%s542] sm:$0xff] %v543
      %s545 = scalar_lea.vmem %s178, 372
      %v546 = vld [vmem:[%s545] sm:$0xf]
      %v547 = vunpack.c.l.bf16 %v546
      %v548 = vunpack.c.h.bf16 %v546
      %s549 = scalar_lea.vmem %s200, 372
      %s550 = scalar_lea.vmem %s549, 4294967292
      %v551 = vpack.c.bf16 %v547, %v318
      %552 = vst [vmem:[%s550] sm:$0xff] %v551
      %s553 = scalar_lea.vmem %s178, 388
      %v554 = vld [vmem:[%s553] sm:$0xf]
      %v555 = vunpack.c.l.bf16 %v554
      %v556 = vunpack.c.h.bf16 %v554
      %s557 = scalar_lea.vmem %s200, 388
      %s558 = scalar_lea.vmem %s557, 4294967292
      %v559 = vpack.c.bf16 %v555, %v323
      %560 = vst [vmem:[%s558] sm:$0xff] %v559
      %s561 = scalar_lea.vmem %s178, 404
      %v562 = vld [vmem:[%s561] sm:$0xf]
      %v563 = vunpack.c.l.bf16 %v562
      %v564 = vunpack.c.h.bf16 %v562
      %s565 = scalar_lea.vmem %s200, 404
      %s566 = scalar_lea.vmem %s565, 4294967292
      %v567 = vpack.c.bf16 %v563, %v328
      %568 = vst [vmem:[%s566] sm:$0xff] %v567
      %s569 = scalar_lea.vmem %s178, 420
      %v570 = vld [vmem:[%s569] sm:$0xf]
      %v571 = vunpack.c.l.bf16 %v570
      %v572 = vunpack.c.h.bf16 %v570
      %s573 = scalar_lea.vmem %s200, 420
      %s574 = scalar_lea.vmem %s573, 4294967292
      %v575 = vpack.c.bf16 %v571, %v333
      %576 = vst [vmem:[%s574] sm:$0xff] %v575
      %s577 = scalar_lea.vmem %s178, 436
      %v578 = vld [vmem:[%s577] sm:$0xf]
      %v579 = vunpack.c.l.bf16 %v578
      %v580 = vunpack.c.h.bf16 %v578
      %s581 = scalar_lea.vmem %s200, 436
      %s582 = scalar_lea.vmem %s581, 4294967292
      %v583 = vpack.c.bf16 %v579, %v338
      %584 = vst [vmem:[%s582] sm:$0xff] %v583
      %s585 = scalar_lea.vmem %s178, 452
      %v586 = vld [vmem:[%s585] sm:$0xf]
      %v587 = vunpack.c.l.bf16 %v586
      %v588 = vunpack.c.h.bf16 %v586
      %s589 = scalar_lea.vmem %s200, 452
      %s590 = scalar_lea.vmem %s589, 4294967292
      %v591 = vpack.c.bf16 %v587, %v343
      %592 = vst [vmem:[%s590] sm:$0xff] %v591
      %s593 = scalar_lea.vmem %s178, 468
      %v594 = vld [vmem:[%s593] sm:$0xf]
      %v595 = vunpack.c.l.bf16 %v594
      %v596 = vunpack.c.h.bf16 %v594
      %s597 = scalar_lea.vmem %s200, 468
      %s598 = scalar_lea.vmem %s597, 4294967292
      %v599 = vpack.c.bf16 %v595, %v348
      %600 = vst [vmem:[%s598] sm:$0xff] %v599
      %s601 = scalar_lea.vmem %s178, 484
      %v602 = vld [vmem:[%s601] sm:$0xf]
      %v603 = vunpack.c.l.bf16 %v602
      %v604 = vunpack.c.h.bf16 %v602
      %s605 = scalar_lea.vmem %s200, 484
      %s606 = scalar_lea.vmem %s605, 4294967292
      %v607 = vpack.c.bf16 %v603, %v353
      %608 = vst [vmem:[%s606] sm:$0xff] %v607
      %s609 = scalar_lea.vmem %s178, 500
      %v610 = vld [vmem:[%s609] sm:$0xf]
      %v611 = vunpack.c.l.bf16 %v610
      %v612 = vunpack.c.h.bf16 %v610
      %s613 = scalar_lea.vmem %s200, 500
      %s614 = scalar_lea.vmem %s613, 4294967292
      %v615 = vpack.c.bf16 %v611, %v358
      %616 = vst [vmem:[%s614] sm:$0xff] %v615
      %s617 = scalar_lea.vmem %s178, 8
      %v618 = vld [vmem:[%s617] sm:$0xf]
      %v619 = vunpack.c.l.bf16 %v618
      %v620 = vunpack.c.h.bf16 %v618
      %s621 = scalar_lea.vmem %s200, 8
      %s622 = scalar_lea.vmem %s178, 24
      %v623 = vld [vmem:[%s622] sm:$0xf]
      %v624 = vunpack.c.l.bf16 %v623
      %v625 = vunpack.c.h.bf16 %v623
      %s626 = scalar_lea.vmem %s200, 24
      %s627 = scalar_lea.vmem %s178, 40
      %v628 = vld [vmem:[%s627] sm:$0xf]
      %v629 = vunpack.c.l.bf16 %v628
      %v630 = vunpack.c.h.bf16 %v628
      %s631 = scalar_lea.vmem %s200, 40
      %s632 = scalar_lea.vmem %s178, 56
      %v633 = vld [vmem:[%s632] sm:$0xf]
      %v634 = vunpack.c.l.bf16 %v633
      %v635 = vunpack.c.h.bf16 %v633
      %s636 = scalar_lea.vmem %s200, 56
      %s637 = scalar_lea.vmem %s178, 72
      %v638 = vld [vmem:[%s637] sm:$0xf]
      %v639 = vunpack.c.l.bf16 %v638
      %v640 = vunpack.c.h.bf16 %v638
      %s641 = scalar_lea.vmem %s200, 72
      %s642 = scalar_lea.vmem %s178, 88
      %v643 = vld [vmem:[%s642] sm:$0xf]
      %v644 = vunpack.c.l.bf16 %v643
      %v645 = vunpack.c.h.bf16 %v643
      %s646 = scalar_lea.vmem %s200, 88
      %s647 = scalar_lea.vmem %s178, 104
      %v648 = vld [vmem:[%s647] sm:$0xf]
      %v649 = vunpack.c.l.bf16 %v648
      %v650 = vunpack.c.h.bf16 %v648
      %s651 = scalar_lea.vmem %s200, 104
      %s652 = scalar_lea.vmem %s178, 120
      %v653 = vld [vmem:[%s652] sm:$0xf]
      %v654 = vunpack.c.l.bf16 %v653
      %v655 = vunpack.c.h.bf16 %v653
      %s656 = scalar_lea.vmem %s200, 120
      %s657 = scalar_lea.vmem %s178, 136
      %v658 = vld [vmem:[%s657] sm:$0xf]
      %v659 = vunpack.c.l.bf16 %v658
      %v660 = vunpack.c.h.bf16 %v658
      %s661 = scalar_lea.vmem %s200, 136
      %s662 = scalar_lea.vmem %s178, 152
      %v663 = vld [vmem:[%s662] sm:$0xf]
      %v664 = vunpack.c.l.bf16 %v663
      %v665 = vunpack.c.h.bf16 %v663
      %s666 = scalar_lea.vmem %s200, 152
      %s667 = scalar_lea.vmem %s178, 168
      %v668 = vld [vmem:[%s667] sm:$0xf]
      %v669 = vunpack.c.l.bf16 %v668
      %v670 = vunpack.c.h.bf16 %v668
      %s671 = scalar_lea.vmem %s200, 168
      %s672 = scalar_lea.vmem %s178, 184
      %v673 = vld [vmem:[%s672] sm:$0xf]
      %v674 = vunpack.c.l.bf16 %v673
      %v675 = vunpack.c.h.bf16 %v673
      %s676 = scalar_lea.vmem %s200, 184
      %s677 = scalar_lea.vmem %s178, 200
      %v678 = vld [vmem:[%s677] sm:$0xf]
      %v679 = vunpack.c.l.bf16 %v678
      %v680 = vunpack.c.h.bf16 %v678
      %s681 = scalar_lea.vmem %s200, 200
      %s682 = scalar_lea.vmem %s178, 216
      %v683 = vld [vmem:[%s682] sm:$0xf]
      %v684 = vunpack.c.l.bf16 %v683
      %v685 = vunpack.c.h.bf16 %v683
      %s686 = scalar_lea.vmem %s200, 216
      %s687 = scalar_lea.vmem %s178, 232
      %v688 = vld [vmem:[%s687] sm:$0xf]
      %v689 = vunpack.c.l.bf16 %v688
      %v690 = vunpack.c.h.bf16 %v688
      %s691 = scalar_lea.vmem %s200, 232
      %s692 = scalar_lea.vmem %s178, 248
      %v693 = vld [vmem:[%s692] sm:$0xf]
      %v694 = vunpack.c.l.bf16 %v693
      %v695 = vunpack.c.h.bf16 %v693
      %s696 = scalar_lea.vmem %s200, 248
      %s697 = scalar_lea.vmem %s178, 264
      %v698 = vld [vmem:[%s697] sm:$0xf]
      %v699 = vunpack.c.l.bf16 %v698
      %v700 = vunpack.c.h.bf16 %v698
      %s701 = scalar_lea.vmem %s200, 264
      %s702 = scalar_lea.vmem %s178, 280
      %v703 = vld [vmem:[%s702] sm:$0xf]
      %v704 = vunpack.c.l.bf16 %v703
      %v705 = vunpack.c.h.bf16 %v703
      %s706 = scalar_lea.vmem %s200, 280
      %s707 = scalar_lea.vmem %s178, 296
      %v708 = vld [vmem:[%s707] sm:$0xf]
      %v709 = vunpack.c.l.bf16 %v708
      %v710 = vunpack.c.h.bf16 %v708
      %s711 = scalar_lea.vmem %s200, 296
      %s712 = scalar_lea.vmem %s178, 312
      %v713 = vld [vmem:[%s712] sm:$0xf]
      %v714 = vunpack.c.l.bf16 %v713
      %v715 = vunpack.c.h.bf16 %v713
      %s716 = scalar_lea.vmem %s200, 312
      %s717 = scalar_lea.vmem %s178, 328
      %v718 = vld [vmem:[%s717] sm:$0xf]
      %v719 = vunpack.c.l.bf16 %v718
      %v720 = vunpack.c.h.bf16 %v718
      %s721 = scalar_lea.vmem %s200, 328
      %s722 = scalar_lea.vmem %s178, 344
      %v723 = vld [vmem:[%s722] sm:$0xf]
      %v724 = vunpack.c.l.bf16 %v723
      %v725 = vunpack.c.h.bf16 %v723
      %s726 = scalar_lea.vmem %s200, 344
      %s727 = scalar_lea.vmem %s178, 360
      %v728 = vld [vmem:[%s727] sm:$0xf]
      %v729 = vunpack.c.l.bf16 %v728
      %v730 = vunpack.c.h.bf16 %v728
      %s731 = scalar_lea.vmem %s200, 360
      %s732 = scalar_lea.vmem %s178, 376
      %v733 = vld [vmem:[%s732] sm:$0xf]
      %v734 = vunpack.c.l.bf16 %v733
      %v735 = vunpack.c.h.bf16 %v733
      %s736 = scalar_lea.vmem %s200, 376
      %s737 = scalar_lea.vmem %s178, 392
      %v738 = vld [vmem:[%s737] sm:$0xf]
      %v739 = vunpack.c.l.bf16 %v738
      %v740 = vunpack.c.h.bf16 %v738
      %s741 = scalar_lea.vmem %s200, 392
      %s742 = scalar_lea.vmem %s178, 408
      %v743 = vld [vmem:[%s742] sm:$0xf]
      %v744 = vunpack.c.l.bf16 %v743
      %v745 = vunpack.c.h.bf16 %v743
      %s746 = scalar_lea.vmem %s200, 408
      %s747 = scalar_lea.vmem %s178, 424
      %v748 = vld [vmem:[%s747] sm:$0xf]
      %v749 = vunpack.c.l.bf16 %v748
      %v750 = vunpack.c.h.bf16 %v748
      %s751 = scalar_lea.vmem %s200, 424
      %s752 = scalar_lea.vmem %s178, 440
      %v753 = vld [vmem:[%s752] sm:$0xf]
      %v754 = vunpack.c.l.bf16 %v753
      %v755 = vunpack.c.h.bf16 %v753
      %s756 = scalar_lea.vmem %s200, 440
      %s757 = scalar_lea.vmem %s178, 456
      %v758 = vld [vmem:[%s757] sm:$0xf]
      %v759 = vunpack.c.l.bf16 %v758
      %v760 = vunpack.c.h.bf16 %v758
      %s761 = scalar_lea.vmem %s200, 456
      %s762 = scalar_lea.vmem %s178, 472
      %v763 = vld [vmem:[%s762] sm:$0xf]
      %v764 = vunpack.c.l.bf16 %v763
      %v765 = vunpack.c.h.bf16 %v763
      %s766 = scalar_lea.vmem %s200, 472
      %s767 = scalar_lea.vmem %s178, 488
      %v768 = vld [vmem:[%s767] sm:$0xf]
      %v769 = vunpack.c.l.bf16 %v768
      %v770 = vunpack.c.h.bf16 %v768
      %s771 = scalar_lea.vmem %s200, 488
      %s772 = scalar_lea.vmem %s178, 504
      %v773 = vld [vmem:[%s772] sm:$0xf]
      %v774 = vunpack.c.l.bf16 %v773
      %v775 = vunpack.c.h.bf16 %v773
      %s776 = scalar_lea.vmem %s200, 504
      %s777 = scalar_lea.vmem %s178, 12
      %v778 = vld [vmem:[%s777] sm:$0xf]
      %v779 = vunpack.c.l.bf16 %v778
      %v780 = vunpack.c.h.bf16 %v778
      %s781 = scalar_lea.vmem %s200, 12
      %s782 = scalar_lea.vmem %s781, 4294967292
      %v783 = vpack.c.bf16 %v779, %v619
      %784 = vst [vmem:[%s782] sm:$0xff] %v783
      %s785 = scalar_lea.vmem %s178, 28
      %v786 = vld [vmem:[%s785] sm:$0xf]
      %v787 = vunpack.c.l.bf16 %v786
      %v788 = vunpack.c.h.bf16 %v786
      %s789 = scalar_lea.vmem %s200, 28
      %s790 = scalar_lea.vmem %s789, 4294967292
      %v791 = vpack.c.bf16 %v787, %v624
      %792 = vst [vmem:[%s790] sm:$0xff] %v791
      %s793 = scalar_lea.vmem %s178, 44
      %v794 = vld [vmem:[%s793] sm:$0xf]
      %v795 = vunpack.c.l.bf16 %v794
      %v796 = vunpack.c.h.bf16 %v794
      %s797 = scalar_lea.vmem %s200, 44
      %s798 = scalar_lea.vmem %s797, 4294967292
      %v799 = vpack.c.bf16 %v795, %v629
      %800 = vst [vmem:[%s798] sm:$0xff] %v799
      %s801 = scalar_lea.vmem %s178, 60
      %v802 = vld [vmem:[%s801] sm:$0xf]
      %v803 = vunpack.c.l.bf16 %v802
      %v804 = vunpack.c.h.bf16 %v802
      %s805 = scalar_lea.vmem %s200, 60
      %s806 = scalar_lea.vmem %s805, 4294967292
      %v807 = vpack.c.bf16 %v803, %v634
      %808 = vst [vmem:[%s806] sm:$0xff] %v807
      %s809 = scalar_lea.vmem %s178, 76
      %v810 = vld [vmem:[%s809] sm:$0xf]
      %v811 = vunpack.c.l.bf16 %v810
      %v812 = vunpack.c.h.bf16 %v810
      %s813 = scalar_lea.vmem %s200, 76
      %s814 = scalar_lea.vmem %s813, 4294967292
      %v815 = vpack.c.bf16 %v811, %v639
      %816 = vst [vmem:[%s814] sm:$0xff] %v815
      %s817 = scalar_lea.vmem %s178, 92
      %v818 = vld [vmem:[%s817] sm:$0xf]
      %v819 = vunpack.c.l.bf16 %v818
      %v820 = vunpack.c.h.bf16 %v818
      %s821 = scalar_lea.vmem %s200, 92
      %s822 = scalar_lea.vmem %s821, 4294967292
      %v823 = vpack.c.bf16 %v819, %v644
      %824 = vst [vmem:[%s822] sm:$0xff] %v823
      %s825 = scalar_lea.vmem %s178, 108
      %v826 = vld [vmem:[%s825] sm:$0xf]
      %v827 = vunpack.c.l.bf16 %v826
      %v828 = vunpack.c.h.bf16 %v826
      %s829 = scalar_lea.vmem %s200, 108
      %s830 = scalar_lea.vmem %s829, 4294967292
      %v831 = vpack.c.bf16 %v827, %v649
      %832 = vst [vmem:[%s830] sm:$0xff] %v831
      %s833 = scalar_lea.vmem %s178, 124
      %v834 = vld [vmem:[%s833] sm:$0xf]
      %v835 = vunpack.c.l.bf16 %v834
      %v836 = vunpack.c.h.bf16 %v834
      %s837 = scalar_lea.vmem %s200, 124
      %s838 = scalar_lea.vmem %s837, 4294967292
      %v839 = vpack.c.bf16 %v835, %v654
      %840 = vst [vmem:[%s838] sm:$0xff] %v839
      %s841 = scalar_lea.vmem %s178, 140
      %v842 = vld [vmem:[%s841] sm:$0xf]
      %v843 = vunpack.c.l.bf16 %v842
      %v844 = vunpack.c.h.bf16 %v842
      %s845 = scalar_lea.vmem %s200, 140
      %s846 = scalar_lea.vmem %s845, 4294967292
      %v847 = vpack.c.bf16 %v843, %v659
      %848 = vst [vmem:[%s846] sm:$0xff] %v847
      %s849 = scalar_lea.vmem %s178, 156
      %v850 = vld [vmem:[%s849] sm:$0xf]
      %v851 = vunpack.c.l.bf16 %v850
      %v852 = vunpack.c.h.bf16 %v850
      %s853 = scalar_lea.vmem %s200, 156
      %s854 = scalar_lea.vmem %s853, 4294967292
      %v855 = vpack.c.bf16 %v851, %v664
      %856 = vst [vmem:[%s854] sm:$0xff] %v855
      %s857 = scalar_lea.vmem %s178, 172
      %v858 = vld [vmem:[%s857] sm:$0xf]
      %v859 = vunpack.c.l.bf16 %v858
      %v860 = vunpack.c.h.bf16 %v858
      %s861 = scalar_lea.vmem %s200, 172
      %s862 = scalar_lea.vmem %s861, 4294967292
      %v863 = vpack.c.bf16 %v859, %v669
      %864 = vst [vmem:[%s862] sm:$0xff] %v863
      %s865 = scalar_lea.vmem %s178, 188
      %v866 = vld [vmem:[%s865] sm:$0xf]
      %v867 = vunpack.c.l.bf16 %v866
      %v868 = vunpack.c.h.bf16 %v866
      %s869 = scalar_lea.vmem %s200, 188
      %s870 = scalar_lea.vmem %s869, 4294967292
      %v871 = vpack.c.bf16 %v867, %v674
      %872 = vst [vmem:[%s870] sm:$0xff] %v871
      %s873 = scalar_lea.vmem %s178, 204
      %v874 = vld [vmem:[%s873] sm:$0xf]
      %v875 = vunpack.c.l.bf16 %v874
      %v876 = vunpack.c.h.bf16 %v874
      %s877 = scalar_lea.vmem %s200, 204
      %s878 = scalar_lea.vmem %s877, 4294967292
      %v879 = vpack.c.bf16 %v875, %v679
      %880 = vst [vmem:[%s878] sm:$0xff] %v879
      %s881 = scalar_lea.vmem %s178, 220
      %v882 = vld [vmem:[%s881] sm:$0xf]
      %v883 = vunpack.c.l.bf16 %v882
      %v884 = vunpack.c.h.bf16 %v882
      %s885 = scalar_lea.vmem %s200, 220
      %s886 = scalar_lea.vmem %s885, 4294967292
      %v887 = vpack.c.bf16 %v883, %v684
      %888 = vst [vmem:[%s886] sm:$0xff] %v887
      %s889 = scalar_lea.vmem %s178, 236
      %v890 = vld [vmem:[%s889] sm:$0xf]
      %v891 = vunpack.c.l.bf16 %v890
      %v892 = vunpack.c.h.bf16 %v890
      %s893 = scalar_lea.vmem %s200, 236
      %s894 = scalar_lea.vmem %s893, 4294967292
      %v895 = vpack.c.bf16 %v891, %v689
      %896 = vst [vmem:[%s894] sm:$0xff] %v895
      %s897 = scalar_lea.vmem %s178, 252
      %v898 = vld [vmem:[%s897] sm:$0xf]
      %v899 = vunpack.c.l.bf16 %v898
      %v900 = vunpack.c.h.bf16 %v898
      %s901 = scalar_lea.vmem %s200, 252
      %s902 = scalar_lea.vmem %s901, 4294967292
      %v903 = vpack.c.bf16 %v899, %v694
      %904 = vst [vmem:[%s902] sm:$0xff] %v903
      %s905 = scalar_lea.vmem %s178, 268
      %v906 = vld [vmem:[%s905] sm:$0xf]
      %v907 = vunpack.c.l.bf16 %v906
      %v908 = vunpack.c.h.bf16 %v906
      %s909 = scalar_lea.vmem %s200, 268
      %s910 = scalar_lea.vmem %s909, 4294967292
      %v911 = vpack.c.bf16 %v907, %v699
      %912 = vst [vmem:[%s910] sm:$0xff] %v911
      %s913 = scalar_lea.vmem %s178, 284
      %v914 = vld [vmem:[%s913] sm:$0xf]
      %v915 = vunpack.c.l.bf16 %v914
      %v916 = vunpack.c.h.bf16 %v914
      %s917 = scalar_lea.vmem %s200, 284
      %s918 = scalar_lea.vmem %s917, 4294967292
      %v919 = vpack.c.bf16 %v915, %v704
      %920 = vst [vmem:[%s918] sm:$0xff] %v919
      %s921 = scalar_lea.vmem %s178, 300
      %v922 = vld [vmem:[%s921] sm:$0xf]
      %v923 = vunpack.c.l.bf16 %v922
      %v924 = vunpack.c.h.bf16 %v922
      %s925 = scalar_lea.vmem %s200, 300
      %s926 = scalar_lea.vmem %s925, 4294967292
      %v927 = vpack.c.bf16 %v923, %v709
      %928 = vst [vmem:[%s926] sm:$0xff] %v927
      %s929 = scalar_lea.vmem %s178, 316
      %v930 = vld [vmem:[%s929] sm:$0xf]
      %v931 = vunpack.c.l.bf16 %v930
      %v932 = vunpack.c.h.bf16 %v930
      %s933 = scalar_lea.vmem %s200, 316
      %s934 = scalar_lea.vmem %s933, 4294967292
      %v935 = vpack.c.bf16 %v931, %v714
      %936 = vst [vmem:[%s934] sm:$0xff] %v935
      %s937 = scalar_lea.vmem %s178, 332
      %v938 = vld [vmem:[%s937] sm:$0xf]
      %v939 = vunpack.c.l.bf16 %v938
      %v940 = vunpack.c.h.bf16 %v938
      %s941 = scalar_lea.vmem %s200, 332
      %s942 = scalar_lea.vmem %s941, 4294967292
      %v943 = vpack.c.bf16 %v939, %v719
      %944 = vst [vmem:[%s942] sm:$0xff] %v943
      %s945 = scalar_lea.vmem %s178, 348
      %v946 = vld [vmem:[%s945] sm:$0xf]
      %v947 = vunpack.c.l.bf16 %v946
      %v948 = vunpack.c.h.bf16 %v946
      %s949 = scalar_lea.vmem %s200, 348
      %s950 = scalar_lea.vmem %s949, 4294967292
      %v951 = vpack.c.bf16 %v947, %v724
      %952 = vst [vmem:[%s950] sm:$0xff] %v951
      %s953 = scalar_lea.vmem %s178, 364
      %v954 = vld [vmem:[%s953] sm:$0xf]
      %v955 = vunpack.c.l.bf16 %v954
      %v956 = vunpack.c.h.bf16 %v954
      %s957 = scalar_lea.vmem %s200, 364
      %s958 = scalar_lea.vmem %s957, 4294967292
      %v959 = vpack.c.bf16 %v955, %v729
      %960 = vst [vmem:[%s958] sm:$0xff] %v959
      %s961 = scalar_lea.vmem %s178, 380
      %v962 = vld [vmem:[%s961] sm:$0xf]
      %v963 = vunpack.c.l.bf16 %v962
      %v964 = vunpack.c.h.bf16 %v962
      %s965 = scalar_lea.vmem %s200, 380
      %s966 = scalar_lea.vmem %s965, 4294967292
      %v967 = vpack.c.bf16 %v963, %v734
      %968 = vst [vmem:[%s966] sm:$0xff] %v967
      %s969 = scalar_lea.vmem %s178, 396
      %v970 = vld [vmem:[%s969] sm:$0xf]
      %v971 = vunpack.c.l.bf16 %v970
      %v972 = vunpack.c.h.bf16 %v970
      %s973 = scalar_lea.vmem %s200, 396
      %s974 = scalar_lea.vmem %s973, 4294967292
      %v975 = vpack.c.bf16 %v971, %v739
      %976 = vst [vmem:[%s974] sm:$0xff] %v975
      %s977 = scalar_lea.vmem %s178, 412
      %v978 = vld [vmem:[%s977] sm:$0xf]
      %v979 = vunpack.c.l.bf16 %v978
      %v980 = vunpack.c.h.bf16 %v978
      %s981 = scalar_lea.vmem %s200, 412
      %s982 = scalar_lea.vmem %s981, 4294967292
      %v983 = vpack.c.bf16 %v979, %v744
      %984 = vst [vmem:[%s982] sm:$0xff] %v983
      %s985 = scalar_lea.vmem %s178, 428
      %v986 = vld [vmem:[%s985] sm:$0xf]
      %v987 = vunpack.c.l.bf16 %v986
      %v988 = vunpack.c.h.bf16 %v986
      %s989 = scalar_lea.vmem %s200, 428
      %s990 = scalar_lea.vmem %s989, 4294967292
      %v991 = vpack.c.bf16 %v987, %v749
      %992 = vst [vmem:[%s990] sm:$0xff] %v991
      %s993 = scalar_lea.vmem %s178, 444
      %v994 = vld [vmem:[%s993] sm:$0xf]
      %v995 = vunpack.c.l.bf16 %v994
      %v996 = vunpack.c.h.bf16 %v994
      %s997 = scalar_lea.vmem %s200, 444
      %s998 = scalar_lea.vmem %s997, 4294967292
      %v999 = vpack.c.bf16 %v995, %v754
      %1000 = vst [vmem:[%s998] sm:$0xff] %v999
      %s1001 = scalar_lea.vmem %s178, 460
      %v1002 = vld [vmem:[%s1001] sm:$0xf]
      %v1003 = vunpack.c.l.bf16 %v1002
      %v1004 = vunpack.c.h.bf16 %v1002
      %s1005 = scalar_lea.vmem %s200, 460
      %s1006 = scalar_lea.vmem %s1005, 4294967292
      %v1007 = vpack.c.bf16 %v1003, %v759
      %1008 = vst [vmem:[%s1006] sm:$0xff] %v1007
      %s1009 = scalar_lea.vmem %s178, 476
      %v1010 = vld [vmem:[%s1009] sm:$0xf]
      %v1011 = vunpack.c.l.bf16 %v1010
      %v1012 = vunpack.c.h.bf16 %v1010
      %s1013 = scalar_lea.vmem %s200, 476
      %s1014 = scalar_lea.vmem %s1013, 4294967292
      %v1015 = vpack.c.bf16 %v1011, %v764
      %1016 = vst [vmem:[%s1014] sm:$0xff] %v1015
      %s1017 = scalar_lea.vmem %s178, 492
      %v1018 = vld [vmem:[%s1017] sm:$0xf]
      %v1019 = vunpack.c.l.bf16 %v1018
      %v1020 = vunpack.c.h.bf16 %v1018
      %s1021 = scalar_lea.vmem %s200, 492
      %s1022 = scalar_lea.vmem %s1021, 4294967292
      %v1023 = vpack.c.bf16 %v1019, %v769
      %1024 = vst [vmem:[%s1022] sm:$0xff] %v1023
      %s1025 = scalar_lea.vmem %s178, 508
      %v1026 = vld [vmem:[%s1025] sm:$0xf]
      %v1027 = vunpack.c.l.bf16 %v1026
      %v1028 = vunpack.c.h.bf16 %v1026
      %s1029 = scalar_lea.vmem %s200, 508
      %s1030 = scalar_lea.vmem %s1029, 4294967292
      %v1031 = vpack.c.bf16 %v1027, %v774
      %1032 = vst [vmem:[%s1030] sm:$0xff] %v1031
      %s1033 = smul.u32 32, %s40
      %s1034 = smul.u32 4, %s41
      %p1035 = scmp.lt.s32.totalorder %s38, 2
      %s1036 = scalar_select %p1035, %s38, 2
      %p1037 = scmp.lt.s32.totalorder %s39, 2
      %s1038 = scalar_select %p1037, %s39, 2
      %p1039 = scmp.lt.s32.totalorder %s1033, 63
      %s1040 = scalar_select %p1039, %s1033, 63
      %p1041 = scmp.lt.s32.totalorder %s1034, 3
      %s1042 = scalar_select %p1041, %s1034, 3
      %s1043 = smul.addr %s1040, 4
      %s1044 = sadd.s32 %s1042, %s1043
      %s1045 = smul.addr %s1038, 256
      %s1046 = sadd.s32 %s1044, %s1045
      %s1047 = smul.addr %s1036, 768
      %s1048 = sadd.s32 %s1046, %s1047
      %s1049 = smul.addr %s1048, 4
      %s1050 = scalar_lea.vmem %s1, %s1049
      %s1051 = smul.u32 32, %s40
      %s1052 = smul.u32 4, %s41
    $region20: #{reverse} parent=5 // pred_fallthru
      _
    %p1053 = scmp.le.s32.totalorder 10, %s3
    // Predicated region
    $region21: #{reverse} parent=5 // pred_check
      %p1054 = pneg %p1053
    $region22: #{reverse} parent=5 // pred_check_branch
      %1056 = sbr.rel (%p1054) target = $region24
    $region23: #{reverse} parent=5 // pred_region
      %s1057 = ssub.s32 %s3, 10
      %s1058 = smul.u32 32, %s60
      %s1059 = smul.u32 4, %s61
      %p1060 = scmp.lt.s32.totalorder %s58, 2
      %s1061 = scalar_select %p1060, %s58, 2
      %p1062 = scmp.lt.s32.totalorder %s59, 2
      %s1063 = scalar_select %p1062, %s59, 2
      %p1064 = scmp.lt.s32.totalorder %s1058, 63
      %s1065 = scalar_select %p1064, %s1058, 63
      %p1066 = scmp.lt.s32.totalorder %s1059, 3
      %s1067 = scalar_select %p1066, %s1059, 3
      %s1068 = smul.addr %s1065, 4
      %s1069 = sadd.s32 %s1067, %s1068
      %s1070 = smul.addr %s1063, 256
      %s1071 = sadd.s32 %s1069, %s1070
      %s1072 = smul.addr %s1061, 768
      %s1073 = sadd.s32 %s1071, %s1072
      %s1074 = smul.addr %s1073, 4
      %s1075 = scalar_lea.vmem %s1, %s1074
    $region24: #{reverse} parent=5 // pred_fallthru
      _
  $region6: #{reverse} parent=0 // loop_footer
    %s7 = sadd.s32 1, %s3
  $region7: #{reverse} parent=0 // loop_footer_branch
    %2 = sbr.rel target = $region3
  $region8: #{reverse} parent=0 // loop_exit
    _

// kernel: _intermodal_triplet_forward.1
$region0: #{_intermodal_triplet_forward.1}
  #allocation0 [shape = 'u32[]', space=smem, size = 0x4, offset = 0x4, fixed_abs, tag = 'smem constant byte address 0x4 - core index']
  #allocation1 [shape = 'u32[72,128]{1,0:T(1,128)}', space=vmem, size = 0x9000, scoped, tag = 'internal scratch']
  %s0 = inlined_call_operand.vmem [shape: f32[2,2], index: 0, kind: input, shape index: {}]
  %s1 = inlined_call_operand.vmem [shape: bf16[2,6,512], index: 1, kind: input, shape index: {}]
  %s2 = inlined_call_operand.vmem [shape: bf16[2,512,256], index: 2, kind: input, shape index: {}]
  %s3 = inlined_call_operand.vmem [shape: f32[2,1,256], index: 3, kind: input, shape index: {}]
  %s4 = inlined_call_operand.vmem [shape: bf16[2,256,256], index: 4, kind: input, shape index: {}]
  %s5 = inlined_call_operand.vmem [shape: f32[2,1,256], index: 5, kind: input, shape index: {}]
  %s6 = inlined_call_operand.vmem [shape: bf16[2,256,128], index: 6, kind: input, shape index: {}]
  %s7 = inlined_call_operand.vmem [shape: f32[2,1,128], index: 7, kind: input, shape index: {}]
  %s8 = inlined_call_operand.vmem [shape: f32[2,6,128], index: 8, kind: output, shape index: {}]
  %s9 = sld [smem:[#allocation0]]
  $region69: #{_intermodal_triplet_forward.1} parent=0
    _
  %s11 = ssub.s32 1, %s9
  %s12 = scalar_select 0, %s11, %s9
  $region1: #{_intermodal_triplet_forward.1} parent=0
    #allocation2 [shape = 'u8[1024]{0}', space=smem, size = 0x400, scoped, tag = 'input window, operand 0, single buffered']
    #allocation3 [shape = 's32[2]{0}', space=sflag, size = 0x8, scoped, tag = 'scoped memory for _intermodal_triplet_forward.1']
    %13 = vsyncpa [#allocation3], 0
    loop: start=0, step=1, limit=4
    $region2: #{_intermodal_triplet_forward.1} parent=1 // loop_pre_header
      _
    $region3: #{_intermodal_triplet_forward.1} parent=1 // loop_header
      %s15 = sphi 0, %s19
      %p16 = scmp.ge.s32.totalorder %s15, 4
      %s22 = sphi 0, %s34
      %s23 = sphi 0, %s30
      %s24 = sphi 0, %s22
      %s25 = sphi 0, %s23
      %s26 = sphi 0, %s24
      %s27 = sphi 0, %s25
      %s35 = sphi 0, %s35
      %s37 = sphi 0, %s35
      %s38 = sphi 0, %s37
      %s52 = sphi 0, %s38
      %s60 = sphi 0, %s62
      %s63 = sphi 0, %s60
      %s64 = sphi 0, %s63
      %s80 = sphi 0, %s64
      %s86 = sphi 0, %s88
      %s89 = sphi 0, %s86
      %s90 = sphi 0, %s89
      %s106 = sphi 0, %s90
      %s112 = sphi 0, %s114
      %s115 = sphi 0, %s112
      %s116 = sphi 0, %s115
      %s132 = sphi 0, %s116
      %s138 = sphi 0, %s140
      %s141 = sphi 0, %s138
      %s142 = sphi 0, %s141
      %s158 = sphi 0, %s142
      %s164 = sphi 0, %s166
      %s167 = sphi 0, %s164
      %s168 = sphi 0, %s167
      %s184 = sphi 0, %s168
      %s190 = sphi 0, %s192
      %s193 = sphi 0, %s190
      %s194 = sphi 0, %s193
      %s210 = sphi 0, %s194
      %s216 = sphi 0, %s218
      %s219 = sphi 0, %s216
      %s220 = sphi 0, %s219
      %s236 = sphi 0, %s220
      %s244 = sphi 0, %s246
      %s247 = sphi 0, %s244
      %s248 = sphi 0, %s247
      %s264 = sphi 0, %s248
    $region4: #{_intermodal_triplet_forward.1} parent=1 // loop_header_branch
      %18 = sbr.rel (%p16) target = $region8
    $region5: #{_intermodal_triplet_forward.1} parent=1 // loop_body
      %s20 = ssub.s32 %s15, 1
      %s21 = ssub.s32 %s15, 2
      %s28 = sadd.s32 1, %s23
      %p29 = scmp.ge.s32.totalorder %s28, 1
      %s30 = scalar_select %p29, 0, %s28
      %s31 = sadd.s32 1, %s22
      %s32 = scalar_select %p29, %s31, %s22
      %p33 = scmp.ge.s32.totalorder %s32, 2
      %s34 = scalar_select %p33, 0, %s32
      %s36 = sadd.s32 %s35, 1
      %p39 = scmp.eq.s32.totalorder %s15, 1
      %p40 = scmp.ne.s32.totalorder %s35, %s37
      %p41 = scmp.eq.s32.totalorder %s15, 0
      %p42 = por %p40, %p41
      %p43 = scmp.ne.s32.totalorder %s35, %s37
      %p44 = scmp.eq.s32.totalorder %s20, 1
      %p45 = por %p43, %p44
      %p46 = scmp.ne.s32.totalorder %s37, %s38
      %p47 = scmp.eq.s32.totalorder %s20, 0
      %p48 = por %p46, %p47
      %p49 = scmp.ne.s32.totalorder %s37, %s38
      %p50 = scmp.eq.s32.totalorder %s21, 1
      %p51 = por %p49, %p50
      %p53 = scmp.ne.s32.totalorder %s38, %s52
      %p54 = scmp.eq.s32.totalorder %s21, 0
      %p55 = por %p53, %p54
      %s56 = ssub.s32 %s22, %s34
      %s57 = ssub.s32 %s23, %s30
      %s58 = sor.u32 %s56, %s57
      %p59 = scmp.eq.s32.totalorder %s58, 0
      %s61 = sadd.s32 %s60, 1
      %s62 = scalar_select %p59, %s60, %s61
      %p65 = pneg %p59
      %p66 = scmp.eq.s32.totalorder %s15, 1
      %p67 = por %p65, %p66
      %p68 = scmp.ne.s32.totalorder %s60, %s63
      %p69 = scmp.eq.s32.totalorder %s15, 0
      %p70 = por %p68, %p69
      %p71 = scmp.ne.s32.totalorder %s60, %s63
      %p72 = scmp.eq.s32.totalorder %s20, 1
      %p73 = por %p71, %p72
      %p74 = scmp.ne.s32.totalorder %s63, %s64
      %p75 = scmp.eq.s32.totalorder %s20, 0
      %p76 = por %p74, %p75
      %p77 = scmp.ne.s32.totalorder %s63, %s64
      %p78 = scmp.eq.s32.totalorder %s21, 1
      %p79 = por %p77, %p78
      %p81 = scmp.ne.s32.totalorder %s64, %s80
      %p82 = scmp.eq.s32.totalorder %s21, 0
      %p83 = por %p81, %p82
      %s84 = ssub.s32 %s22, %s34
      %p85 = scmp.eq.s32.totalorder %s84, 0
      %s87 = sadd.s32 %s86, 1
      %s88 = scalar_select %p85, %s86, %s87
      %p91 = pneg %p85
      %p92 = scmp.eq.s32.totalorder %s15, 1
      %p93 = por %p91, %p92
      %p94 = scmp.ne.s32.totalorder %s86, %s89
      %p95 = scmp.eq.s32.totalorder %s15, 0
      %p96 = por %p94, %p95
      %p97 = scmp.ne.s32.totalorder %s86, %s89
      %p98 = scmp.eq.s32.totalorder %s20, 1
      %p99 = por %p97, %p98
      %p100 = scmp.ne.s32.totalorder %s89, %s90
      %p101 = scmp.eq.s32.totalorder %s20, 0
      %p102 = por %p100, %p101
      %p103 = scmp.ne.s32.totalorder %s89, %s90
      %p104 = scmp.eq.s32.totalorder %s21, 1
      %p105 = por %p103, %p104
      %p107 = scmp.ne.s32.totalorder %s90, %s106
      %p108 = scmp.eq.s32.totalorder %s21, 0
      %p109 = por %p107, %p108
      %s110 = ssub.s32 %s22, %s34
      %p111 = scmp.eq.s32.totalorder %s110, 0
      %s113 = sadd.s32 %s112, 1
      %s114 = scalar_select %p111, %s112, %s113
      %p117 = pneg %p111
      %p118 = scmp.eq.s32.totalorder %s15, 1
      %p119 = por %p117, %p118
      %p120 = scmp.ne.s32.totalorder %s112, %s115
      %p121 = scmp.eq.s32.totalorder %s15, 0
      %p122 = por %p120, %p121
      %p123 = scmp.ne.s32.totalorder %s112, %s115
      %p124 = scmp.eq.s32.totalorder %s20, 1
      %p125 = por %p123, %p124
      %p126 = scmp.ne.s32.totalorder %s115, %s116
      %p127 = scmp.eq.s32.totalorder %s20, 0
      %p128 = por %p126, %p127
      %p129 = scmp.ne.s32.totalorder %s115, %s116
      %p130 = scmp.eq.s32.totalorder %s21, 1
      %p131 = por %p129, %p130
      %p133 = scmp.ne.s32.totalorder %s116, %s132
      %p134 = scmp.eq.s32.totalorder %s21, 0
      %p135 = por %p133, %p134
      %s136 = ssub.s32 %s22, %s34
      %p137 = scmp.eq.s32.totalorder %s136, 0
      %s139 = sadd.s32 %s138, 1
      %s140 = scalar_select %p137, %s138, %s139
      %p143 = pneg %p137
      %p144 = scmp.eq.s32.totalorder %s15, 1
      %p145 = por %p143, %p144
      %p146 = scmp.ne.s32.totalorder %s138, %s141
      %p147 = scmp.eq.s32.totalorder %s15, 0
      %p148 = por %p146, %p147
      %p149 = scmp.ne.s32.totalorder %s138, %s141
      %p150 = scmp.eq.s32.totalorder %s20, 1
      %p151 = por %p149, %p150
      %p152 = scmp.ne.s32.totalorder %s141, %s142
      %p153 = scmp.eq.s32.totalorder %s20, 0
      %p154 = por %p152, %p153
      %p155 = scmp.ne.s32.totalorder %s141, %s142
      %p156 = scmp.eq.s32.totalorder %s21, 1
      %p157 = por %p155, %p156
      %p159 = scmp.ne.s32.totalorder %s142, %s158
      %p160 = scmp.eq.s32.totalorder %s21, 0
      %p161 = por %p159, %p160
      %s162 = ssub.s32 %s22, %s34
      %p163 = scmp.eq.s32.totalorder %s162, 0
      %s165 = sadd.s32 %s164, 1
      %s166 = scalar_select %p163, %s164, %s165
      %p169 = pneg %p163
      %p170 = scmp.eq.s32.totalorder %s15, 1
      %p171 = por %p169, %p170
      %p172 = scmp.ne.s32.totalorder %s164, %s167
      %p173 = scmp.eq.s32.totalorder %s15, 0
      %p174 = por %p172, %p173
      %p175 = scmp.ne.s32.totalorder %s164, %s167
      %p176 = scmp.eq.s32.totalorder %s20, 1
      %p177 = por %p175, %p176
      %p178 = scmp.ne.s32.totalorder %s167, %s168
      %p179 = scmp.eq.s32.totalorder %s20, 0
      %p180 = por %p178, %p179
      %p181 = scmp.ne.s32.totalorder %s167, %s168
      %p182 = scmp.eq.s32.totalorder %s21, 1
      %p183 = por %p181, %p182
      %p185 = scmp.ne.s32.totalorder %s168, %s184
      %p186 = scmp.eq.s32.totalorder %s21, 0
      %p187 = por %p185, %p186
      %s188 = ssub.s32 %s22, %s34
      %p189 = scmp.eq.s32.totalorder %s188, 0
      %s191 = sadd.s32 %s190, 1
      %s192 = scalar_select %p189, %s190, %s191
      %p195 = pneg %p189
      %p196 = scmp.eq.s32.totalorder %s15, 1
      %p197 = por %p195, %p196
      %p198 = scmp.ne.s32.totalorder %s190, %s193
      %p199 = scmp.eq.s32.totalorder %s15, 0
      %p200 = por %p198, %p199
      %p201 = scmp.ne.s32.totalorder %s190, %s193
      %p202 = scmp.eq.s32.totalorder %s20, 1
      %p203 = por %p201, %p202
      %p204 = scmp.ne.s32.totalorder %s193, %s194
      %p205 = scmp.eq.s32.totalorder %s20, 0
      %p206 = por %p204, %p205
      %p207 = scmp.ne.s32.totalorder %s193, %s194
      %p208 = scmp.eq.s32.totalorder %s21, 1
      %p209 = por %p207, %p208
      %p211 = scmp.ne.s32.totalorder %s194, %s210
      %p212 = scmp.eq.s32.totalorder %s21, 0
      %p213 = por %p211, %p212
      %s214 = ssub.s32 %s22, %s34
      %p215 = scmp.eq.s32.totalorder %s214, 0
      %s217 = sadd.s32 %s216, 1
      %s218 = scalar_select %p215, %s216, %s217
      %p221 = pneg %p215
      %p222 = scmp.eq.s32.totalorder %s15, 1
      %p223 = por %p221, %p222
      %p224 = scmp.ne.s32.totalorder %s216, %s219
      %p225 = scmp.eq.s32.totalorder %s15, 0
      %p226 = por %p224, %p225
      %p227 = scmp.ne.s32.totalorder %s216, %s219
      %p228 = scmp.eq.s32.totalorder %s20, 1
      %p229 = por %p227, %p228
      %p230 = scmp.ne.s32.totalorder %s219, %s220
      %p231 = scmp.eq.s32.totalorder %s20, 0
      %p232 = por %p230, %p231
      %p233 = scmp.ne.s32.totalorder %s219, %s220
      %p234 = scmp.eq.s32.totalorder %s21, 1
      %p235 = por %p233, %p234
      %p237 = scmp.ne.s32.totalorder %s220, %s236
      %p238 = scmp.eq.s32.totalorder %s21, 0
      %p239 = por %p237, %p238
      %s240 = ssub.s32 %s22, %s34
      %s241 = ssub.s32 %s23, %s30
      %s242 = sor.u32 %s240, %s241
      %p243 = scmp.eq.s32.totalorder %s242, 0
      %s245 = sadd.s32 %s244, 1
      %s246 = scalar_select %p243, %s244, %s245
      %p249 = pneg %p243
      %p250 = scmp.eq.s32.totalorder %s15, 1
      %p251 = por %p249, %p250
      %p252 = scmp.ne.s32.totalorder %s244, %s247
      %p253 = scmp.eq.s32.totalorder %s15, 0
      %p254 = por %p252, %p253
      %p255 = scmp.ne.s32.totalorder %s244, %s247
      %p256 = scmp.eq.s32.totalorder %s20, 1
      %p257 = por %p255, %p256
      %p258 = scmp.ne.s32.totalorder %s247, %s248
      %p259 = scmp.eq.s32.totalorder %s20, 0
      %p260 = por %p258, %p259
      %p261 = scmp.ne.s32.totalorder %s247, %s248
      %p262 = scmp.eq.s32.totalorder %s21, 1
      %p263 = por %p261, %p262
      %p265 = scmp.ne.s32.totalorder %s248, %s264
      %p266 = scmp.eq.s32.totalorder %s21, 0
      %p267 = por %p265, %p266
      %p268 = scmp.le.s32.totalorder 1, %s15
      %p269 = scmp.lt.s32.totalorder %s15, 3
      %p270 = pnand %p268, %p269
      %p271 = pneg %p270
      // Predicated region
      $region9: #{_intermodal_triplet_forward.1} parent=5 // pred_check
        _
      $region10: #{_intermodal_triplet_forward.1} parent=5 // pred_check_branch
        %273 = sbr.rel (%p270) target = $region12
      $region11: #{_intermodal_triplet_forward.1} parent=5 // pred_region
        %s274 = ssub.s32 %s15, 1
        // Predicated region
        $region13: #{_intermodal_triplet_forward.1} parent=11 // pred_check
          %p275 = pneg %p48
        $region14: #{_intermodal_triplet_forward.1} parent=11 // pred_check_branch
          %277 = sbr.rel (%p275) target = $region16
        $region15: #{_intermodal_triplet_forward.1} parent=11 // pred_region
          %279 = vsyncadd [#allocation3], 0
          %s281 = sshll.u32 %s0, 4
          %s282 = int_to_ptr.vmem [resolvable:$true] %s281
          %284 = dma.vmem_to_smem %s282, 32, [#allocation2], [#allocation3]
        $region16: #{_intermodal_triplet_forward.1} parent=11 // pred_fallthru
          _
      $region12: #{_intermodal_triplet_forward.1} parent=5 // pred_fallthru
        _
      %p285 = scmp.lt.s32.totalorder %s15, 2
      // Predicated region
      $region17: #{_intermodal_triplet_forward.1} parent=5 // pred_check
        %p286 = pneg %p285
      $region18: #{_intermodal_triplet_forward.1} parent=5 // pred_check_branch
        %288 = sbr.rel (%p286) target = $region20
      $region19: #{_intermodal_triplet_forward.1} parent=5 // pred_region
        // Predicated region
        $region21: #{_intermodal_triplet_forward.1} parent=19 // pred_check
          %p289 = pneg %p70
        $region22: #{_intermodal_triplet_forward.1} parent=19 // pred_check_branch
          %291 = sbr.rel (%p289) target = $region24
        $region23: #{_intermodal_triplet_forward.1} parent=19 // pred_region
          %p292 = scmp.lt.s32.totalorder %s22, 1
          %s293 = scalar_select %p292, %s22, 1
          %p294 = scmp.lt.s32.totalorder %s23, 0
          %s295 = scalar_select %p294, %s23, 0
          %s296 = smul.addr %s295, 4
          %s297 = smul.addr %s293, 4
          %s298 = sadd.s32 %s296, %s297
          %s299 = smul.addr %s298, 4
          %s300 = scalar_lea.vmem %s1, %s299
        $region24: #{_intermodal_triplet_forward.1} parent=19 // pred_fallthru
          _
        // Predicated region
        $region25: #{_intermodal_triplet_forward.1} parent=19 // pred_check
          %p301 = pneg %p96
        $region26: #{_intermodal_triplet_forward.1} parent=19 // pred_check_branch
          %303 = sbr.rel (%p301) target = $region28
        $region27: #{_intermodal_triplet_forward.1} parent=19 // pred_region
          %p304 = scmp.lt.s32.totalorder %s22, 1
          %s305 = scalar_select %p304, %s22, 1
          %s306 = smul.addr %s305, 128
          %s307 = smul.addr %s306, 4
          %s308 = scalar_lea.vmem %s2, %s307
        $region28: #{_intermodal_triplet_forward.1} parent=19 // pred_fallthru
          _
        // Predicated region
        $region29: #{_intermodal_triplet_forward.1} parent=19 // pred_check
          %p309 = pneg %p122
        $region30: #{_intermodal_triplet_forward.1} parent=19 // pred_check_branch
          %311 = sbr.rel (%p309) target = $region32
        $region31: #{_intermodal_triplet_forward.1} parent=19 // pred_region
          %p312 = scmp.lt.s32.totalorder %s22, 1
          %s313 = scalar_select %p312, %s22, 1
          %s314 = smul.addr %s313, 2
          %s315 = scalar_lea.vmem %s3, %s314
        $region32: #{_intermodal_triplet_forward.1} parent=19 // pred_fallthru
          _
        // Predicated region
        $region33: #{_intermodal_triplet_forward.1} parent=19 // pred_check
          %p316 = pneg %p148
        $region34: #{_intermodal_triplet_forward.1} parent=19 // pred_check_branch
          %318 = sbr.rel (%p316) target = $region36
        $region35: #{_intermodal_triplet_forward.1} parent=19 // pred_region
          %p319 = scmp.lt.s32.totalorder %s22, 1
          %s320 = scalar_select %p319, %s22, 1
          %s321 = smul.addr %s320, 64
          %s322 = smul.addr %s321, 4
          %s323 = scalar_lea.vmem %s4, %s322
        $region36: #{_intermodal_triplet_forward.1} parent=19 // pred_fallthru
          _
        // Predicated region
        $region37: #{_intermodal_triplet_forward.1} parent=19 // pred_check
          %p324 = pneg %p174
        $region38: #{_intermodal_triplet_forward.1} parent=19 // pred_check_branch
          %326 = sbr.rel (%p324) target = $region40
        $region39: #{_intermodal_triplet_forward.1} parent=19 // pred_region
          %p327 = scmp.lt.s32.totalorder %s22, 1
          %s328 = scalar_select %p327, %s22, 1
          %s329 = smul.addr %s328, 2
          %s330 = scalar_lea.vmem %s5, %s329
        $region40: #{_intermodal_triplet_forward.1} parent=19 // pred_fallthru
          _
        // Predicated region
        $region41: #{_intermodal_triplet_forward.1} parent=19 // pred_check
          %p331 = pneg %p200
        $region42: #{_intermodal_triplet_forward.1} parent=19 // pred_check_branch
          %333 = sbr.rel (%p331) target = $region44
        $region43: #{_intermodal_triplet_forward.1} parent=19 // pred_region
          %p334 = scmp.lt.s32.totalorder %s22, 1
          %s335 = scalar_select %p334, %s22, 1
          %s336 = smul.addr %s335, 32
          %s337 = smul.addr %s336, 4
          %s338 = scalar_lea.vmem %s6, %s337
        $region44: #{_intermodal_triplet_forward.1} parent=19 // pred_fallthru
          _
        // Predicated region
        $region45: #{_intermodal_triplet_forward.1} parent=19 // pred_check
          %p339 = pneg %p226
        $region46: #{_intermodal_triplet_forward.1} parent=19 // pred_check_branch
          %341 = sbr.rel (%p339) target = $region48
        $region47: #{_intermodal_triplet_forward.1} parent=19 // pred_region
          %p342 = scmp.lt.s32.totalorder %s22, 1
          %s343 = scalar_select %p342, %s22, 1
          %s344 = scalar_lea.vmem %s7, %s343
        $region48: #{_intermodal_triplet_forward.1} parent=19 // pred_fallthru
          _
      $region20: #{_intermodal_triplet_forward.1} parent=5 // pred_fallthru
        _
      %p345 = scmp.le.s32.totalorder 1, %s15
      %p346 = scmp.lt.s32.totalorder %s15, 3
      %p347 = pnand %p345, %p346
      %p348 = pneg %p347
      // Predicated region
      $region49: #{_intermodal_triplet_forward.1} parent=5 // pred_check
        _
      $region50: #{_intermodal_triplet_forward.1} parent=5 // pred_check_branch
        %350 = sbr.rel (%p347) target = $region52
      $region51: #{_intermodal_triplet_forward.1} parent=5 // pred_region
        %s351 = ssub.s32 %s15, 1
        // Predicated region
        $region53: #{_intermodal_triplet_forward.1} parent=51 // pred_check
          %p352 = pneg %p48
        $region54: #{_intermodal_triplet_forward.1} parent=51 // pred_check_branch
          %354 = sbr.rel (%p352) target = $region56
        $region55: #{_intermodal_triplet_forward.1} parent=51 // pred_region
          %356 = dma.done [#allocation3], 32
        $region56: #{_intermodal_triplet_forward.1} parent=51 // pred_fallthru
          _
        %357 = sfence
        %p358 = pneg %p48
        %p359 = pneg %p45
        %p360 = scmp.lt.s32.totalorder %s24, 1
        %s361 = scalar_select %p360, %s24, 1
        %p362 = scmp.lt.s32.totalorder %s25, 0
        %s363 = scalar_select %p362, %s25, 0
        %s364 = smul.addr %s363, 4
        %s365 = smul.addr %s361, 4
        %s366 = sadd.s32 %s364, %s365
        %s367 = smul.addr %s366, 4
        %s368 = scalar_lea.vmem %s1, %s367
        %p369 = pneg %p76
        %p370 = pneg %p73
        %p371 = scmp.lt.s32.totalorder %s24, 1
        %s372 = scalar_select %p371, %s24, 1
        %s373 = smul.addr %s372, 128
        %s374 = smul.addr %s373, 4
        %s375 = scalar_lea.vmem %s2, %s374
        %p376 = pneg %p102
        %p377 = pneg %p99
        %p378 = scmp.lt.s32.totalorder %s24, 1
        %s379 = scalar_select %p378, %s24, 1
        %s380 = smul.addr %s379, 2
        %s381 = scalar_lea.vmem %s3, %s380
        %p382 = pneg %p128
        %p383 = pneg %p125
        %p384 = scmp.lt.s32.totalorder %s24, 1
        %s385 = scalar_select %p384, %s24, 1
        %s386 = smul.addr %s385, 64
        %s387 = smul.addr %s386, 4
        %s388 = scalar_lea.vmem %s4, %s387
        %p389 = pneg %p154
        %p390 = pneg %p151
        %p391 = scmp.lt.s32.totalorder %s24, 1
        %s392 = scalar_select %p391, %s24, 1
        %s393 = smul.addr %s392, 2
        %s394 = scalar_lea.vmem %s5, %s393
        %p395 = pneg %p180
        %p396 = pneg %p177
        %p397 = scmp.lt.s32.totalorder %s24, 1
        %s398 = scalar_select %p397, %s24, 1
        %s399 = smul.addr %s398, 32
        %s400 = smul.addr %s399, 4
        %s401 = scalar_lea.vmem %s6, %s400
        %p402 = pneg %p206
        %p403 = pneg %p203
        %p404 = scmp.lt.s32.totalorder %s24, 1
        %s405 = scalar_select %p404, %s24, 1
        %s406 = scalar_lea.vmem %s7, %s405
        %p407 = pneg %p232
        %p408 = pneg %p229
        %p409 = pneg %p260
        %p410 = pneg %p257
        %p411 = scmp.lt.s32.totalorder %s24, 1
        %s412 = scalar_select %p411, %s24, 1
        %p413 = scmp.lt.s32.totalorder %s25, 0
        %s414 = scalar_select %p413, %s25, 0
        %s415 = sadd.s32 %s414, %s412
        %s416 = smul.addr %s415, 8
        %s417 = scalar_lea.vmem %s8, %s416
        %p418 = scmp.lt.s32.totalorder %s24, 1
        %s419 = scalar_select %p418, %s24, 1
        %p420 = scmp.lt.s32.totalorder %s25, 0
        %s421 = scalar_select %p420, %s25, 0
        %s422 = smul.addr %s421, 4
        %s423 = smul.addr %s419, 4
        %s424 = sadd.s32 %s422, %s423
        %s425 = smul.addr %s424, 4
        %s426 = scalar_lea.vmem %s1, %s425
        %p427 = scmp.lt.s32.totalorder %s24, 1
        %s428 = scalar_select %p427, %s24, 1
        %s429 = smul.addr %s428, 128
        %s430 = smul.addr %s429, 4
        %s431 = scalar_lea.vmem %s2, %s430
        %p432 = scmp.lt.s32.totalorder %s24, 1
        %s433 = scalar_select %p432, %s24, 1
        %s434 = smul.addr %s433, 2
        %s435 = scalar_lea.vmem %s3, %s434
        %p436 = scmp.lt.s32.totalorder %s24, 1
        %s437 = scalar_select %p436, %s24, 1
        %s438 = smul.addr %s437, 64
        %s439 = smul.addr %s438, 4
        %s440 = scalar_lea.vmem %s4, %s439
        %p441 = scmp.lt.s32.totalorder %s24, 1
        %s442 = scalar_select %p441, %s24, 1
        %s443 = smul.addr %s442, 2
        %s444 = scalar_lea.vmem %s5, %s443
        %p445 = scmp.lt.s32.totalorder %s24, 1
        %s446 = scalar_select %p445, %s24, 1
        %s447 = smul.addr %s446, 32
        %s448 = smul.addr %s447, 4
        %s449 = scalar_lea.vmem %s6, %s448
        %p450 = scmp.lt.s32.totalorder %s24, 1
        %s451 = scalar_select %p450, %s24, 1
        %s452 = scalar_lea.vmem %s7, %s451
        %p453 = scmp.lt.s32.totalorder %s24, 1
        %s454 = scalar_select %p453, %s24, 1
        %p455 = scmp.lt.s32.totalorder %s25, 0
        %s456 = scalar_select %p455, %s25, 0
        %s457 = sadd.s32 %s456, %s454
        %s458 = smul.addr %s457, 8
        %s459 = scalar_lea.vmem %s8, %s458
        %v460 = vld [vmem:[%s426] sm:$0x77]
        %v461 = vld [vmem:[%s426 + $0x8] sm:$0x77]
        %v462 = vld [vmem:[%s431] sm:$0xff]
        %v463 = vld [vmem:[%s431 + $0x8] sm:$0xff]
        %v464 = vld [vmem:[%s431 + $0x10] sm:$0xff]
        %v465 = vld [vmem:[%s431 + $0x18] sm:$0xff]
        %v466 = vld [vmem:[%s431 + $0x20] sm:$0xff]
        %v467 = vld [vmem:[%s431 + $0x28] sm:$0xff]
        %v468 = vld [vmem:[%s431 + $0x30] sm:$0xff]
        %v469 = vld [vmem:[%s431 + $0x38] sm:$0xff]
        %v470 = vld [vmem:[%s431 + $0x40] sm:$0xff]
        %v471 = vld [vmem:[%s431 + $0x48] sm:$0xff]
        %v472 = vld [vmem:[%s431 + $0x50] sm:$0xff]
        %v473 = vld [vmem:[%s431 + $0x58] sm:$0xff]
        %v474 = vld [vmem:[%s431 + $0x60] sm:$0xff]
        %v475 = vld [vmem:[%s431 + $0x68] sm:$0xff]
        %v476 = vld [vmem:[%s431 + $0x70] sm:$0xff]
        %v477 = vld [vmem:[%s431 + $0x78] sm:$0xff]
        %v478 = vld [vmem:[%s431 + $0x80] sm:$0xff]
        %v479 = vld [vmem:[%s431 + $0x88] sm:$0xff]
        %v480 = vld [vmem:[%s431 + $0x90] sm:$0xff]
        %v481 = vld [vmem:[%s431 + $0x98] sm:$0xff]
        %v482 = vld [vmem:[%s431 + $0xa0] sm:$0xff]
        %v483 = vld [vmem:[%s431 + $0xa8] sm:$0xff]
        %v484 = vld [vmem:[%s431 + $0xb0] sm:$0xff]
        %v485 = vld [vmem:[%s431 + $0xb8] sm:$0xff]
        %v486 = vld [vmem:[%s431 + $0xc0] sm:$0xff]
        %v487 = vld [vmem:[%s431 + $0xc8] sm:$0xff]
        %v488 = vld [vmem:[%s431 + $0xd0] sm:$0xff]
        %v489 = vld [vmem:[%s431 + $0xd8] sm:$0xff]
        %v490 = vld [vmem:[%s431 + $0xe0] sm:$0xff]
        %v491 = vld [vmem:[%s431 + $0xe8] sm:$0xff]
        %v492 = vld [vmem:[%s431 + $0xf0] sm:$0xff]
        %v493 = vld [vmem:[%s431 + $0xf8] sm:$0xff]
        %v494 = vld [vmem:[%s431 + $0x100] sm:$0xff]
        %v495 = vld [vmem:[%s431 + $0x108] sm:$0xff]
        %v496 = vld [vmem:[%s431 + $0x110] sm:$0xff]
        %v497 = vld [vmem:[%s431 + $0x118] sm:$0xff]
        %v498 = vld [vmem:[%s431 + $0x120] sm:$0xff]
        %v499 = vld [vmem:[%s431 + $0x128] sm:$0xff]
        %v500 = vld [vmem:[%s431 + $0x130] sm:$0xff]
        %v501 = vld [vmem:[%s431 + $0x138] sm:$0xff]
        %v502 = vld [vmem:[%s431 + $0x140] sm:$0xff]
        %v503 = vld [vmem:[%s431 + $0x148] sm:$0xff]
        %v504 = vld [vmem:[%s431 + $0x150] sm:$0xff]
        %v505 = vld [vmem:[%s431 + $0x158] sm:$0xff]
        %v506 = vld [vmem:[%s431 + $0x160] sm:$0xff]
        %v507 = vld [vmem:[%s431 + $0x168] sm:$0xff]
        %v508 = vld [vmem:[%s431 + $0x170] sm:$0xff]
        %v509 = vld [vmem:[%s431 + $0x178] sm:$0xff]
        %v510 = vld [vmem:[%s431 + $0x180] sm:$0xff]
        %v511 = vld [vmem:[%s431 + $0x188] sm:$0xff]
        %v512 = vld [vmem:[%s431 + $0x190] sm:$0xff]
        %v513 = vld [vmem:[%s431 + $0x198] sm:$0xff]
        %v514 = vld [vmem:[%s431 + $0x1a0] sm:$0xff]
        %v515 = vld [vmem:[%s431 + $0x1a8] sm:$0xff]
        %v516 = vld [vmem:[%s431 + $0x1b0] sm:$0xff]
        %v517 = vld [vmem:[%s431 + $0x1b8] sm:$0xff]
        %v518 = vld [vmem:[%s431 + $0x1c0] sm:$0xff]
        %v519 = vld [vmem:[%s431 + $0x1c8] sm:$0xff]
        %v520 = vld [vmem:[%s431 + $0x1d0] sm:$0xff]
        %v521 = vld [vmem:[%s431 + $0x1d8] sm:$0xff]
        %v522 = vld [vmem:[%s431 + $0x1e0] sm:$0xff]
        %v523 = vld [vmem:[%s431 + $0x1e8] sm:$0xff]
        %v524 = vld [vmem:[%s431 + $0x1f0] sm:$0xff]
        %v525 = vld [vmem:[%s431 + $0x1f8] sm:$0xff]
        %v526 = vld [vmem:[%s435] sm:$0x3]
        %v528 = vperm.slane %v526, 0
        %v529 = vperm.slane %v526, 1
        %v534 = vunpack.c.l.b16 %v460
        %v535 = vunpack.c.h.b16 %v460
        %v536 = vunpack.c.l.b16 %v461
        %v537 = vunpack.c.h.b16 %v461
        %v538 = vpack.c.b16 %v534, %v534
        %v539 = vpack.c.b16 %v535, %v535
        %v540 = vpack.c.b16 %v536, %v536
        %v541 = vpack.c.b16 %v537, %v537
        %v610 = vunpack.c.l.b16 %v462
        %v611 = vunpack.c.h.b16 %v462
        %v612 = vunpack.c.l.b16 %v463
        %v613 = vunpack.c.h.b16 %v463
        %v614 = vunpack.c.l.b16 %v464
        %v615 = vunpack.c.h.b16 %v464
        %v616 = vunpack.c.l.b16 %v465
        %v617 = vunpack.c.h.b16 %v465
        %v618 = vunpack.c.l.b16 %v466
        %v619 = vunpack.c.h.b16 %v466
        %v620 = vunpack.c.l.b16 %v467
        %v621 = vunpack.c.h.b16 %v467
        %v622 = vunpack.c.l.b16 %v468
        %v623 = vunpack.c.h.b16 %v468
        %v624 = vunpack.c.l.b16 %v469
        %v625 = vunpack.c.h.b16 %v469
        %v626 = vunpack.c.l.b16 %v470
        %v627 = vunpack.c.h.b16 %v470
        %v628 = vunpack.c.l.b16 %v471
        %v629 = vunpack.c.h.b16 %v471
        %v630 = vunpack.c.l.b16 %v472
        %v631 = vunpack.c.h.b16 %v472
        %v632 = vunpack.c.l.b16 %v473
        %v633 = vunpack.c.h.b16 %v473
        %v634 = vunpack.c.l.b16 %v474
        %v635 = vunpack.c.h.b16 %v474
        %v636 = vunpack.c.l.b16 %v475
        %v637 = vunpack.c.h.b16 %v475
        %v638 = vunpack.c.l.b16 %v476
        %v639 = vunpack.c.h.b16 %v476
        %v640 = vunpack.c.l.b16 %v477
        %v641 = vunpack.c.h.b16 %v477
        %v642 = vunpack.c.l.b16 %v478
        %v643 = vunpack.c.h.b16 %v478
        %v644 = vunpack.c.l.b16 %v479
        %v645 = vunpack.c.h.b16 %v479
        %v646 = vunpack.c.l.b16 %v480
        %v647 = vunpack.c.h.b16 %v480
        %v648 = vunpack.c.l.b16 %v481
        %v649 = vunpack.c.h.b16 %v481
        %v650 = vunpack.c.l.b16 %v482
        %v651 = vunpack.c.h.b16 %v482
        %v652 = vunpack.c.l.b16 %v483
        %v653 = vunpack.c.h.b16 %v483
        %v654 = vunpack.c.l.b16 %v484
        %v655 = vunpack.c.h.b16 %v484
        %v656 = vunpack.c.l.b16 %v485
        %v657 = vunpack.c.h.b16 %v485
        %v658 = vunpack.c.l.b16 %v486
        %v659 = vunpack.c.h.b16 %v486
        %v660 = vunpack.c.l.b16 %v487
        %v661 = vunpack.c.h.b16 %v487
        %v662 = vunpack.c.l.b16 %v488
        %v663 = vunpack.c.h.b16 %v488
        %v664 = vunpack.c.l.b16 %v489
        %v665 = vunpack.c.h.b16 %v489
        %v666 = vunpack.c.l.b16 %v490
        %v667 = vunpack.c.h.b16 %v490
        %v668 = vunpack.c.l.b16 %v491
        %v669 = vunpack.c.h.b16 %v491
        %v670 = vunpack.c.l.b16 %v492
        %v671 = vunpack.c.h.b16 %v492
        %v672 = vunpack.c.l.b16 %v493
        %v673 = vunpack.c.h.b16 %v493
        %v674 = vunpack.c.l.b16 %v494
        %v675 = vunpack.c.h.b16 %v494
        %v676 = vunpack.c.l.b16 %v495
        %v677 = vunpack.c.h.b16 %v495
        %v678 = vunpack.c.l.b16 %v496
        %v679 = vunpack.c.h.b16 %v496
        %v680 = vunpack.c.l.b16 %v497
        %v681 = vunpack.c.h.b16 %v497
        %v682 = vunpack.c.l.b16 %v498
        %v683 = vunpack.c.h.b16 %v498
        %v684 = vunpack.c.l.b16 %v499
        %v685 = vunpack.c.h.b16 %v499
        %v686 = vunpack.c.l.b16 %v500
        %v687 = vunpack.c.h.b16 %v500
        %v688 = vunpack.c.l.b16 %v501
        %v689 = vunpack.c.h.b16 %v501
        %v690 = vunpack.c.l.b16 %v502
        %v691 = vunpack.c.h.b16 %v502
        %v692 = vunpack.c.l.b16 %v503
        %v693 = vunpack.c.h.b16 %v503
        %v694 = vunpack.c.l.b16 %v504
        %v695 = vunpack.c.h.b16 %v504
        %v696 = vunpack.c.l.b16 %v505
        %v697 = vunpack.c.h.b16 %v505
        %v698 = vunpack.c.l.b16 %v506
        %v699 = vunpack.c.h.b16 %v506
        %v700 = vunpack.c.l.b16 %v507
        %v701 = vunpack.c.h.b16 %v507
        %v702 = vunpack.c.l.b16 %v508
        %v703 = vunpack.c.h.b16 %v508
        %v704 = vunpack.c.l.b16 %v509
        %v705 = vunpack.c.h.b16 %v509
        %v706 = vunpack.c.l.b16 %v510
        %v707 = vunpack.c.h.b16 %v510
        %v708 = vunpack.c.l.b16 %v511
        %v709 = vunpack.c.h.b16 %v511
        %v710 = vunpack.c.l.b16 %v512
        %v711 = vunpack.c.h.b16 %v512
        %v712 = vunpack.c.l.b16 %v513
        %v713 = vunpack.c.h.b16 %v513
        %v714 = vunpack.c.l.b16 %v514
        %v715 = vunpack.c.h.b16 %v514
        %v716 = vunpack.c.l.b16 %v515
        %v717 = vunpack.c.h.b16 %v515
        %v718 = vunpack.c.l.b16 %v516
        %v719 = vunpack.c.h.b16 %v516
        %v720 = vunpack.c.l.b16 %v517
        %v721 = vunpack.c.h.b16 %v517
        %v722 = vunpack.c.l.b16 %v518
        %v723 = vunpack.c.h.b16 %v518
        %v724 = vunpack.c.l.b16 %v519
        %v725 = vunpack.c.h.b16 %v519
        %v726 = vunpack.c.l.b16 %v520
        %v727 = vunpack.c.h.b16 %v520
        %v728 = vunpack.c.l.b16 %v521
        %v729 = vunpack.c.h.b16 %v521
        %v730 = vunpack.c.l.b16 %v522
        %v731 = vunpack.c.h.b16 %v522
        %v732 = vunpack.c.l.b16 %v523
        %v733 = vunpack.c.h.b16 %v523
        %v734 = vunpack.c.l.b16 %v524
        %v735 = vunpack.c.h.b16 %v524
        %v736 = vunpack.c.l.b16 %v525
        %v737 = vunpack.c.h.b16 %v525
        %v738 = vpack.c.b16 %v612, %v610
        %v739 = vpack.c.b16 %v613, %v611
        %v740 = vpack.c.b16 %v616, %v614
        %v741 = vpack.c.b16 %v617, %v615
        %v742 = vpack.c.b16 %v620, %v618
        %v743 = vpack.c.b16 %v621, %v619
        %v744 = vpack.c.b16 %v624, %v622
        %v745 = vpack.c.b16 %v625, %v623
        %v746 = vpack.c.b16 %v628, %v626
        %v747 = vpack.c.b16 %v629, %v627
        %v748 = vpack.c.b16 %v632, %v630
        %v749 = vpack.c.b16 %v633, %v631
        %v750 = vpack.c.b16 %v636, %v634
        %v751 = vpack.c.b16 %v637, %v635
        %v752 = vpack.c.b16 %v640, %v638
        %v753 = vpack.c.b16 %v641, %v639
        %v754 = vpack.c.b16 %v644, %v642
        %v755 = vpack.c.b16 %v645, %v643
        %v756 = vpack.c.b16 %v648, %v646
        %v757 = vpack.c.b16 %v649, %v647
        %v758 = vpack.c.b16 %v652, %v650
        %v759 = vpack.c.b16 %v653, %v651
        %v760 = vpack.c.b16 %v656, %v654
        %v761 = vpack.c.b16 %v657, %v655
        %v762 = vpack.c.b16 %v660, %v658
        %v763 = vpack.c.b16 %v661, %v659
        %v764 = vpack.c.b16 %v664, %v662
        %v765 = vpack.c.b16 %v665, %v663
        %v766 = vpack.c.b16 %v668, %v666
        %v767 = vpack.c.b16 %v669, %v667
        %v768 = vpack.c.b16 %v672, %v670
        %v769 = vpack.c.b16 %v673, %v671
        %v770 = vpack.c.b16 %v676, %v674
        %v771 = vpack.c.b16 %v677, %v675
        %v772 = vpack.c.b16 %v680, %v678
        %v773 = vpack.c.b16 %v681, %v679
        %v774 = vpack.c.b16 %v684, %v682
        %v775 = vpack.c.b16 %v685, %v683
        %v776 = vpack.c.b16 %v688, %v686
        %v777 = vpack.c.b16 %v689, %v687
        %v778 = vpack.c.b16 %v692, %v690
        %v779 = vpack.c.b16 %v693, %v691
        %v780 = vpack.c.b16 %v696, %v694
        %v781 = vpack.c.b16 %v697, %v695
        %v782 = vpack.c.b16 %v700, %v698
        %v783 = vpack.c.b16 %v701, %v699
        %v784 = vpack.c.b16 %v704, %v702
        %v785 = vpack.c.b16 %v705, %v703
        %v786 = vpack.c.b16 %v708, %v706
        %v787 = vpack.c.b16 %v709, %v707
        %v788 = vpack.c.b16 %v712, %v710
        %v789 = vpack.c.b16 %v713, %v711
        %v790 = vpack.c.b16 %v716, %v714
        %v791 = vpack.c.b16 %v717, %v715
        %v792 = vpack.c.b16 %v720, %v718
        %v793 = vpack.c.b16 %v721, %v719
        %v794 = vpack.c.b16 %v724, %v722
        %v795 = vpack.c.b16 %v725, %v723
        %v796 = vpack.c.b16 %v728, %v726
        %v797 = vpack.c.b16 %v729, %v727
        %v798 = vpack.c.b16 %v732, %v730
        %v799 = vpack.c.b16 %v733, %v731
        %v800 = vpack.c.b16 %v736, %v734
        %v801 = vpack.c.b16 %v737, %v735
        %866 = vmatpush.bf16.msra.mxu0 %v752
        %867 = vmatpush.bf16.msra.mxu0 %v750
        %868 = vmatpush.bf16.msra.mxu0 %v748
        %869 = vmatpush.bf16.msra.mxu0 %v746
        %870 = vmatpush.bf16.msra.mxu0 %v744
        %871 = vmatpush.bf16.msra.mxu0 %v742
        %872 = vmatpush.bf16.msra.mxu0 %v740
        %873 = vmatpush.bf16.msra.mxu0 %v738
        %874 = vmatmul.bf16.gmra.mxu0 %v538
        %v875 = vpop.f32.mrf.mxu0
        %v876 = vadd.f32 %v528, %v875
        %v877 = vpop.f32.mrf.mxu0
        %878 = vdwg.mxu0
        %879 = vmatpush.bf16.msra.mxu0 %v768
        %880 = vmatpush.bf16.msra.mxu0 %v766
        %881 = vmatpush.bf16.msra.mxu0 %v764
        %882 = vmatpush.bf16.msra.mxu0 %v762
        %883 = vmatpush.bf16.msra.mxu0 %v760
        %884 = vmatpush.bf16.msra.mxu0 %v758
        %885 = vmatpush.bf16.msra.mxu0 %v756
        %886 = vmatpush.bf16.msra.mxu0 %v754
        %887 = vmatmul.bf16.gmra.mxu0 %v539
        %v888 = vpop.f32.mrf.mxu0
        %v889 = vadd.f32 %v876, %v888
        %v890 = vpop.f32.mrf.mxu0
        %891 = vdwg.mxu0
        %892 = vmatpush.bf16.msra.mxu0 %v784
        %893 = vmatpush.bf16.msra.mxu0 %v782
        %894 = vmatpush.bf16.msra.mxu0 %v780
        %895 = vmatpush.bf16.msra.mxu0 %v778
        %896 = vmatpush.bf16.msra.mxu0 %v776
        %897 = vmatpush.bf16.msra.mxu0 %v774
        %898 = vmatpush.bf16.msra.mxu0 %v772
        %899 = vmatpush.bf16.msra.mxu0 %v770
        %900 = vmatmul.bf16.gmra.mxu0 %v540
        %v901 = vpop.f32.mrf.mxu0
        %v902 = vadd.f32 %v889, %v901
        %v903 = vpop.f32.mrf.mxu0
        %904 = vdwg.mxu0
        %905 = vmatpush.bf16.msra.mxu0 %v800
        %906 = vmatpush.bf16.msra.mxu0 %v798
        %907 = vmatpush.bf16.msra.mxu0 %v796
        %908 = vmatpush.bf16.msra.mxu0 %v794
        %909 = vmatpush.bf16.msra.mxu0 %v792
        %910 = vmatpush.bf16.msra.mxu0 %v790
        %911 = vmatpush.bf16.msra.mxu0 %v788
        %912 = vmatpush.bf16.msra.mxu0 %v786
        %913 = vmatmul.bf16.gmra.mxu0 %v541
        %v914 = vpop.f32.mrf.mxu0
        %v915 = vadd.f32 %v902, %v914
        %v916 = vpop.f32.mrf.mxu0
        %917 = vdwg.mxu0
        %918 = vmatpush.bf16.msra.mxu0 %v753
        %919 = vmatpush.bf16.msra.mxu0 %v751
        %920 = vmatpush.bf16.msra.mxu0 %v749
        %921 = vmatpush.bf16.msra.mxu0 %v747
        %922 = vmatpush.bf16.msra.mxu0 %v745
        %923 = vmatpush.bf16.msra.mxu0 %v743
        %924 = vmatpush.bf16.msra.mxu0 %v741
        %925 = vmatpush.bf16.msra.mxu0 %v739
        %926 = vmatmul.bf16.gmra.mxu0 %v538
        %v927 = vpop.f32.mrf.mxu0
        %v928 = vadd.f32 %v529, %v927
        %v929 = vpop.f32.mrf.mxu0
        %930 = vdwg.mxu0
        %931 = vmatpush.bf16.msra.mxu0 %v769
        %932 = vmatpush.bf16.msra.mxu0 %v767
        %933 = vmatpush.bf16.msra.mxu0 %v765
        %934 = vmatpush.bf16.msra.mxu0 %v763
        %935 = vmatpush.bf16.msra.mxu0 %v761
        %936 = vmatpush.bf16.msra.mxu0 %v759
        %937 = vmatpush.bf16.msra.mxu0 %v757
        %938 = vmatpush.bf16.msra.mxu0 %v755
        %939 = vmatmul.bf16.gmra.mxu0 %v539
        %v940 = vpop.f32.mrf.mxu0
        %v941 = vadd.f32 %v928, %v940
        %v942 = vpop.f32.mrf.mxu0
        %943 = vdwg.mxu0
        %944 = vmatpush.bf16.msra.mxu0 %v785
        %945 = vmatpush.bf16.msra.mxu0 %v783
        %946 = vmatpush.bf16.msra.mxu0 %v781
        %947 = vmatpush.bf16.msra.mxu0 %v779
        %948 = vmatpush.bf16.msra.mxu0 %v777
        %949 = vmatpush.bf16.msra.mxu0 %v775
        %950 = vmatpush.bf16.msra.mxu0 %v773
        %951 = vmatpush.bf16.msra.mxu0 %v771
        %952 = vmatmul.bf16.gmra.mxu0 %v540
        %v953 = vpop.f32.mrf.mxu0
        %v954 = vadd.f32 %v941, %v953
        %v955 = vpop.f32.mrf.mxu0
        %956 = vdwg.mxu0
        %957 = vmatpush.bf16.msra.mxu0 %v801
        %958 = vmatpush.bf16.msra.mxu0 %v799
        %959 = vmatpush.bf16.msra.mxu0 %v797
        %960 = vmatpush.bf16.msra.mxu0 %v795
        %961 = vmatpush.bf16.msra.mxu0 %v793
        %962 = vmatpush.bf16.msra.mxu0 %v791
        %963 = vmatpush.bf16.msra.mxu0 %v789
        %964 = vmatpush.bf16.msra.mxu0 %v787
        %965 = vmatmul.bf16.gmra.mxu0 %v541
        %v966 = vpop.f32.mrf.mxu0
        %v967 = vadd.f32 %v954, %v966
        %v968 = vpop.f32.mrf.mxu0
        %969 = vdwg.mxu0
        %vm970 = vcmp.ge.f32.partialorder %v915, 0.0
        %vm971 = vcmp.ge.f32.partialorder %v967, 0.0
        %s972 = smul.u32 %s24, 128
        %s973 = sld [smem:[#allocation2 + %s972]]
        %v974 = vstv %s973
        %v975 = vmul.f32 %v974, %v915
        %v976 = vmul.f32 %v974, %v967
        %v977 = vsel %vm970, %v915, %v975
        %v978 = vsel %vm971, %v967, %v976
        %v979 = vpack.c.bf16 %v977, %v977
        %v980 = vpack.c.bf16 %v978, %v978
        %v981 = vld [vmem:[%s440] sm:$0xff]
        %v982 = vld [vmem:[%s440 + $0x8] sm:$0xff]
        %v983 = vld [vmem:[%s440 + $0x10] sm:$0xff]
        %v984 = vld [vmem:[%s440 + $0x18] sm:$0xff]
        %v985 = vld [vmem:[%s440 + $0x20] sm:$0xff]
        %v986 = vld [vmem:[%s440 + $0x28] sm:$0xff]
        %v987 = vld [vmem:[%s440 + $0x30] sm:$0xff]
        %v988 = vld [vmem:[%s440 + $0x38] sm:$0xff]
        %v989 = vld [vmem:[%s440 + $0x40] sm:$0xff]
        %v990 = vld [vmem:[%s440 + $0x48] sm:$0xff]
        %v991 = vld [vmem:[%s440 + $0x50] sm:$0xff]
        %v992 = vld [vmem:[%s440 + $0x58] sm:$0xff]
        %v993 = vld [vmem:[%s440 + $0x60] sm:$0xff]
        %v994 = vld [vmem:[%s440 + $0x68] sm:$0xff]
        %v995 = vld [vmem:[%s440 + $0x70] sm:$0xff]
        %v996 = vld [vmem:[%s440 + $0x78] sm:$0xff]
        %v997 = vld [vmem:[%s440 + $0x80] sm:$0xff]
        %v998 = vld [vmem:[%s440 + $0x88] sm:$0xff]
        %v999 = vld [vmem:[%s440 + $0x90] sm:$0xff]
        %v1000 = vld [vmem:[%s440 + $0x98] sm:$0xff]
        %v1001 = vld [vmem:[%s440 + $0xa0] sm:$0xff]
        %v1002 = vld [vmem:[%s440 + $0xa8] sm:$0xff]
        %v1003 = vld [vmem:[%s440 + $0xb0] sm:$0xff]
        %v1004 = vld [vmem:[%s440 + $0xb8] sm:$0xff]
        %v1005 = vld [vmem:[%s440 + $0xc0] sm:$0xff]
        %v1006 = vld [vmem:[%s440 + $0xc8] sm:$0xff]
        %v1007 = vld [vmem:[%s440 + $0xd0] sm:$0xff]
        %v1008 = vld [vmem:[%s440 + $0xd8] sm:$0xff]
        %v1009 = vld [vmem:[%s440 + $0xe0] sm:$0xff]
        %v1010 = vld [vmem:[%s440 + $0xe8] sm:$0xff]
        %v1011 = vld [vmem:[%s440 + $0xf0] sm:$0xff]
        %v1012 = vld [vmem:[%s440 + $0xf8] sm:$0xff]
        %v1013 = vld [vmem:[%s444] sm:$0x3]
        %v1015 = vperm.slane %v1013, 0
        %v1016 = vperm.slane %v1013, 1
        %v1051 = vunpack.c.l.b16 %v981
        %v1052 = vunpack.c.h.b16 %v981
        %v1053 = vunpack.c.l.b16 %v982
        %v1054 = vunpack.c.h.b16 %v982
        %v1055 = vunpack.c.l.b16 %v983
        %v1056 = vunpack.c.h.b16 %v983
        %v1057 = vunpack.c.l.b16 %v984
        %v1058 = vunpack.c.h.b16 %v984
        %v1059 = vunpack.c.l.b16 %v985
        %v1060 = vunpack.c.h.b16 %v985
        %v1061 = vunpack.c.l.b16 %v986
        %v1062 = vunpack.c.h.b16 %v986
        %v1063 = vunpack.c.l.b16 %v987
        %v1064 = vunpack.c.h.b16 %v987
        %v1065 = vunpack.c.l.b16 %v988
        %v1066 = vunpack.c.h.b16 %v988
        %v1067 = vunpack.c.l.b16 %v989
        %v1068 = vunpack.c.h.b16 %v989
        %v1069 = vunpack.c.l.b16 %v990
        %v1070 = vunpack.c.h.b16 %v990
        %v1071 = vunpack.c.l.b16 %v991
        %v1072 = vunpack.c.h.b16 %v991
        %v1073 = vunpack.c.l.b16 %v992
        %v1074 = vunpack.c.h.b16 %v992
        %v1075 = vunpack.c.l.b16 %v993
        %v1076 = vunpack.c.h.b16 %v993
        %v1077 = vunpack.c.l.b16 %v994
        %v1078 = vunpack.c.h.b16 %v994
        %v1079 = vunpack.c.l.b16 %v995
        %v1080 = vunpack.c.h.b16 %v995
        %v1081 = vunpack.c.l.b16 %v996
        %v1082 = vunpack.c.h.b16 %v996
        %v1083 = vunpack.c.l.b16 %v997
        %v1084 = vunpack.c.h.b16 %v997
        %v1085 = vunpack.c.l.b16 %v998
        %v1086 = vunpack.c.h.b16 %v998
        %v1087 = vunpack.c.l.b16 %v999
        %v1088 = vunpack.c.h.b16 %v999
        %v1089 = vunpack.c.l.b16 %v1000
        %v1090 = vunpack.c.h.b16 %v1000
        %v1091 = vunpack.c.l.b16 %v1001
        %v1092 = vunpack.c.h.b16 %v1001
        %v1093 = vunpack.c.l.b16 %v1002
        %v1094 = vunpack.c.h.b16 %v1002
        %v1095 = vunpack.c.l.b16 %v1003
        %v1096 = vunpack.c.h.b16 %v1003
        %v1097 = vunpack.c.l.b16 %v1004
        %v1098 = vunpack.c.h.b16 %v1004
        %v1099 = vunpack.c.l.b16 %v1005
        %v1100 = vunpack.c.h.b16 %v1005
        %v1101 = vunpack.c.l.b16 %v1006
        %v1102 = vunpack.c.h.b16 %v1006
        %v1103 = vunpack.c.l.b16 %v1007
        %v1104 = vunpack.c.h.b16 %v1007
        %v1105 = vunpack.c.l.b16 %v1008
        %v1106 = vunpack.c.h.b16 %v1008
        %v1107 = vunpack.c.l.b16 %v1009
        %v1108 = vunpack.c.h.b16 %v1009
        %v1109 = vunpack.c.l.b16 %v1010
        %v1110 = vunpack.c.h.b16 %v1010
        %v1111 = vunpack.c.l.b16 %v1011
        %v1112 = vunpack.c.h.b16 %v1011
        %v1113 = vunpack.c.l.b16 %v1012
        %v1114 = vunpack.c.h.b16 %v1012
        %v1115 = vpack.c.b16 %v1053, %v1051
        %v1116 = vpack.c.b16 %v1054, %v1052
        %v1117 = vpack.c.b16 %v1057, %v1055
        %v1118 = vpack.c.b16 %v1058, %v1056
        %v1119 = vpack.c.b16 %v1061, %v1059
        %v1120 = vpack.c.b16 %v1062, %v1060
        %v1121 = vpack.c.b16 %v1065, %v1063
        %v1122 = vpack.c.b16 %v1066, %v1064
        %v1123 = vpack.c.b16 %v1069, %v1067
        %v1124 = vpack.c.b16 %v1070, %v1068
        %v1125 = vpack.c.b16 %v1073, %v1071
        %v1126 = vpack.c.b16 %v1074, %v1072
        %v1127 = vpack.c.b16 %v1077, %v1075
        %v1128 = vpack.c.b16 %v1078, %v1076
        %v1129 = vpack.c.b16 %v1081, %v1079
        %v1130 = vpack.c.b16 %v1082, %v1080
        %v1131 = vpack.c.b16 %v1085, %v1083
        %v1132 = vpack.c.b16 %v1086, %v1084
        %v1133 = vpack.c.b16 %v1089, %v1087
        %v1134 = vpack.c.b16 %v1090, %v1088
        %v1135 = vpack.c.b16 %v1093, %v1091
        %v1136 = vpack.c.b16 %v1094, %v1092
        %v1137 = vpack.c.b16 %v1097, %v1095
        %v1138 = vpack.c.b16 %v1098, %v1096
        %v1139 = vpack.c.b16 %v1101, %v1099
        %v1140 = vpack.c.b16 %v1102, %v1100
        %v1141 = vpack.c.b16 %v1105, %v1103
        %v1142 = vpack.c.b16 %v1106, %v1104
        %v1143 = vpack.c.b16 %v1109, %v1107
        %v1144 = vpack.c.b16 %v1110, %v1108
        %v1145 = vpack.c.b16 %v1113, %v1111
        %v1146 = vpack.c.b16 %v1114, %v1112
        %1179 = vmatpush.bf16.msra.mxu0 %v1129
        %1180 = vmatpush.bf16.msra.mxu0 %v1127
        %1181 = vmatpush.bf16.msra.mxu0 %v1125
        %1182 = vmatpush.bf16.msra.mxu0 %v1123
        %1183 = vmatpush.bf16.msra.mxu0 %v1121
        %1184 = vmatpush.bf16.msra.mxu0 %v1119
        %1185 = vmatpush.bf16.msra.mxu0 %v1117
        %1186 = vmatpush.bf16.msra.mxu0 %v1115
        %1187 = vmatmul.bf16.gmra.mxu0 %v979
        %v1188 = vpop.f32.mrf.mxu0
        %v1189 = vadd.f32 %v1015, %v1188
        %v1190 = vpop.f32.mrf.mxu0
        %1191 = vdwg.mxu0
        %1192 = vmatpush.bf16.msra.mxu0 %v1145
        %1193 = vmatpush.bf16.msra.mxu0 %v1143
        %1194 = vmatpush.bf16.msra.mxu0 %v1141
        %1195 = vmatpush.bf16.msra.mxu0 %v1139
        %1196 = vmatpush.bf16.msra.mxu0 %v1137
        %1197 = vmatpush.bf16.msra.mxu0 %v1135
        %1198 = vmatpush.bf16.msra.mxu0 %v1133
        %1199 = vmatpush.bf16.msra.mxu0 %v1131
        %1200 = vmatmul.bf16.gmra.mxu0 %v980
        %v1201 = vpop.f32.mrf.mxu0
        %v1202 = vadd.f32 %v1189, %v1201
        %v1203 = vpop.f32.mrf.mxu0
        %1204 = vdwg.mxu0
        %1205 = vmatpush.bf16.msra.mxu0 %v1130
        %1206 = vmatpush.bf16.msra.mxu0 %v1128
        %1207 = vmatpush.bf16.msra.mxu0 %v1126
        %1208 = vmatpush.bf16.msra.mxu0 %v1124
        %1209 = vmatpush.bf16.msra.mxu0 %v1122
        %1210 = vmatpush.bf16.msra.mxu0 %v1120
        %1211 = vmatpush.bf16.msra.mxu0 %v1118
        %1212 = vmatpush.bf16.msra.mxu0 %v1116
        %1213 = vmatmul.bf16.gmra.mxu0 %v979
        %v1214 = vpop.f32.mrf.mxu0
        %v1215 = vadd.f32 %v1016, %v1214
        %v1216 = vpop.f32.mrf.mxu0
        %1217 = vdwg.mxu0
        %1218 = vmatpush.bf16.msra.mxu0 %v1146
        %1219 = vmatpush.bf16.msra.mxu0 %v1144
        %1220 = vmatpush.bf16.msra.mxu0 %v1142
        %1221 = vmatpush.bf16.msra.mxu0 %v1140
        %1222 = vmatpush.bf16.msra.mxu0 %v1138
        %1223 = vmatpush.bf16.msra.mxu0 %v1136
        %1224 = vmatpush.bf16.msra.mxu0 %v1134
        %1225 = vmatpush.bf16.msra.mxu0 %v1132
        %1226 = vmatmul.bf16.gmra.mxu0 %v980
        %v1227 = vpop.f32.mrf.mxu0
        %v1228 = vadd.f32 %v1215, %v1227
        %v1229 = vpop.f32.mrf.mxu0
        %1230 = vdwg.mxu0
        %vm1231 = vcmp.ge.f32.partialorder %v1202, 0.0
        %vm1232 = vcmp.ge.f32.partialorder %v1228, 0.0
        %s1233 = sadd.s32 %s972, 1
        %s1234 = sld [smem:[#allocation2 + %s1233]]
        %v1235 = vstv %s1234
        %v1236 = vmul.f32 %v1235, %v1202
        %v1237 = vmul.f32 %v1235, %v1228
        %v1238 = vsel %vm1231, %v1202, %v1236
        %v1239 = vsel %vm1232, %v1228, %v1237
        %v1240 = vpack.c.bf16 %v1238, %v1238
        %v1241 = vpack.c.bf16 %v1239, %v1239
        %v1242 = vld [vmem:[%s449] sm:$0xf]
        %v1243 = vld [vmem:[%s449 + $0x4] sm:$0xf]
        %v1244 = vld [vmem:[%s449 + $0x8] sm:$0xf]
        %v1245 = vld [vmem:[%s449 + $0xc] sm:$0xf]
        %v1246 = vld [vmem:[%s449 + $0x10] sm:$0xf]
        %v1247 = vld [vmem:[%s449 + $0x14] sm:$0xf]
        %v1248 = vld [vmem:[%s449 + $0x18] sm:$0xf]
        %v1249 = vld [vmem:[%s449 + $0x1c] sm:$0xf]
        %v1250 = vld [vmem:[%s449 + $0x20] sm:$0xf]
        %v1251 = vld [vmem:[%s449 + $0x24] sm:$0xf]
        %v1252 = vld [vmem:[%s449 + $0x28] sm:$0xf]
        %v1253 = vld [vmem:[%s449 + $0x2c] sm:$0xf]
        %v1254 = vld [vmem:[%s449 + $0x30] sm:$0xf]
        %v1255 = vld [vmem:[%s449 + $0x34] sm:$0xf]
        %v1256 = vld [vmem:[%s449 + $0x38] sm:$0xf]
        %v1257 = vld [vmem:[%s449 + $0x3c] sm:$0xf]
        %v1258 = vld [vmem:[%s449 + $0x40] sm:$0xf]
        %v1259 = vld [vmem:[%s449 + $0x44] sm:$0xf]
        %v1260 = vld [vmem:[%s449 + $0x48] sm:$0xf]
        %v1261 = vld [vmem:[%s449 + $0x4c] sm:$0xf]
        %v1262 = vld [vmem:[%s449 + $0x50] sm:$0xf]
        %v1263 = vld [vmem:[%s449 + $0x54] sm:$0xf]
        %v1264 = vld [vmem:[%s449 + $0x58] sm:$0xf]
        %v1265 = vld [vmem:[%s449 + $0x5c] sm:$0xf]
        %v1266 = vld [vmem:[%s449 + $0x60] sm:$0xf]
        %v1267 = vld [vmem:[%s449 + $0x64] sm:$0xf]
        %v1268 = vld [vmem:[%s449 + $0x68] sm:$0xf]
        %v1269 = vld [vmem:[%s449 + $0x6c] sm:$0xf]
        %v1270 = vld [vmem:[%s449 + $0x70] sm:$0xf]
        %v1271 = vld [vmem:[%s449 + $0x74] sm:$0xf]
        %v1272 = vld [vmem:[%s449 + $0x78] sm:$0xf]
        %v1273 = vld [vmem:[%s449 + $0x7c] sm:$0xf]
        %v1274 = vld [vmem:[%s452] sm:$0x1]
        %v1276 = vperm.slane %v1274, 0
        %v1310 = vunpack.c.l.b16 %v1242
        %v1311 = vunpack.c.l.b16 %v1243
        %v1312 = vunpack.c.l.b16 %v1244
        %v1313 = vunpack.c.l.b16 %v1245
        %v1314 = vunpack.c.l.b16 %v1246
        %v1315 = vunpack.c.l.b16 %v1247
        %v1316 = vunpack.c.l.b16 %v1248
        %v1317 = vunpack.c.l.b16 %v1249
        %v1318 = vunpack.c.l.b16 %v1250
        %v1319 = vunpack.c.l.b16 %v1251
        %v1320 = vunpack.c.l.b16 %v1252
        %v1321 = vunpack.c.l.b16 %v1253
        %v1322 = vunpack.c.l.b16 %v1254
        %v1323 = vunpack.c.l.b16 %v1255
        %v1324 = vunpack.c.l.b16 %v1256
        %v1325 = vunpack.c.l.b16 %v1257
        %v1326 = vunpack.c.l.b16 %v1258
        %v1327 = vunpack.c.l.b16 %v1259
        %v1328 = vunpack.c.l.b16 %v1260
        %v1329 = vunpack.c.l.b16 %v1261
        %v1330 = vunpack.c.l.b16 %v1262
        %v1331 = vunpack.c.l.b16 %v1263
        %v1332 = vunpack.c.l.b16 %v1264
        %v1333 = vunpack.c.l.b16 %v1265
        %v1334 = vunpack.c.l.b16 %v1266
        %v1335 = vunpack.c.l.b16 %v1267
        %v1336 = vunpack.c.l.b16 %v1268
        %v1337 = vunpack.c.l.b16 %v1269
        %v1338 = vunpack.c.l.b16 %v1270
        %v1339 = vunpack.c.l.b16 %v1271
        %v1340 = vunpack.c.l.b16 %v1272
        %v1341 = vunpack.c.l.b16 %v1273
        %v1342 = vpack.c.b16 %v1311, %v1310
        %v1343 = vpack.c.b16 %v1313, %v1312
        %v1344 = vpack.c.b16 %v1315, %v1314
        %v1345 = vpack.c.b16 %v1317, %v1316
        %v1346 = vpack.c.b16 %v1319, %v1318
        %v1347 = vpack.c.b16 %v1321, %v1320
        %v1348 = vpack.c.b16 %v1323, %v1322
        %v1349 = vpack.c.b16 %v1325, %v1324
        %v1350 = vpack.c.b16 %v1327, %v1326
        %v1351 = vpack.c.b16 %v1329, %v1328
        %v1352 = vpack.c.b16 %v1331, %v1330
        %v1353 = vpack.c.b16 %v1333, %v1332
        %v1354 = vpack.c.b16 %v1335, %v1334
        %v1355 = vpack.c.b16 %v1337, %v1336
        %v1356 = vpack.c.b16 %v1339, %v1338
        %v1357 = vpack.c.b16 %v1341, %v1340
        %1374 = vmatpush.bf16.msra.mxu0 %v1349
        %1375 = vmatpush.bf16.msra.mxu0 %v1348
        %1376 = vmatpush.bf16.msra.mxu0 %v1347
        %1377 = vmatpush.bf16.msra.mxu0 %v1346
        %1378 = vmatpush.bf16.msra.mxu0 %v1345
        %1379 = vmatpush.bf16.msra.mxu0 %v1344
        %1380 = vmatpush.bf16.msra.mxu0 %v1343
        %1381 = vmatpush.bf16.msra.mxu0 %v1342
        %1382 = vmatmul.bf16.gmra.mxu0 %v1240
        %v1383 = vpop.f32.mrf.mxu0
        %v1384 = vadd.f32 %v1276, %v1383
        %v1385 = vpop.f32.mrf.mxu0
        %1386 = vdwg.mxu0
        %1387 = vmatpush.bf16.msra.mxu0 %v1357
        %1388 = vmatpush.bf16.msra.mxu0 %v1356
        %1389 = vmatpush.bf16.msra.mxu0 %v1355
        %1390 = vmatpush.bf16.msra.mxu0 %v1354
        %1391 = vmatpush.bf16.msra.mxu0 %v1353
        %1392 = vmatpush.bf16.msra.mxu0 %v1352
        %1393 = vmatpush.bf16.msra.mxu0 %v1351
        %1394 = vmatpush.bf16.msra.mxu0 %v1350
        %1395 = vmatmul.bf16.gmra.mxu0 %v1241
        %v1396 = vpop.f32.mrf.mxu0
        %v1397 = vadd.f32 %v1384, %v1396
        %v1398 = vpop.f32.mrf.mxu0
        %1399 = vdwg.mxu0
        %1400 = vst [vmem:[%s459] sm:$0x3f] %v1397
        %p1401 = scmp.lt.s32.totalorder %s24, 1
        %s1402 = scalar_select %p1401, %s24, 1
        %p1403 = scmp.lt.s32.totalorder %s25, 0
        %s1404 = scalar_select %p1403, %s25, 0
        %s1405 = sadd.s32 %s1404, %s1402
        %s1406 = smul.addr %s1405, 8
        %s1407 = scalar_lea.vmem %s8, %s1406
        // Predicated region
        $region57: #{_intermodal_triplet_forward.1} parent=51 // pred_check
          %p1408 = pneg %p257
        $region58: #{_intermodal_triplet_forward.1} parent=51 // pred_check_branch
          %1410 = sbr.rel (%p1408) target = $region60
        $region59: #{_intermodal_triplet_forward.1} parent=51 // pred_region
          _
        $region60: #{_intermodal_triplet_forward.1} parent=51 // pred_fallthru
          _
      $region52: #{_intermodal_triplet_forward.1} parent=5 // pred_fallthru
        _
      %p1411 = scmp.le.s32.totalorder 2, %s15
      // Predicated region
      $region61: #{_intermodal_triplet_forward.1} parent=5 // pred_check
        %p1412 = pneg %p1411
      $region62: #{_intermodal_triplet_forward.1} parent=5 // pred_check_branch
        %1414 = sbr.rel (%p1412) target = $region64
      $region63: #{_intermodal_triplet_forward.1} parent=5 // pred_region
        %s1415 = ssub.s32 %s15, 2
        // Predicated region
        $region65: #{_intermodal_triplet_forward.1} parent=63 // pred_check
          %p1416 = pneg %p263
        $region66: #{_intermodal_triplet_forward.1} parent=63 // pred_check_branch
          %1418 = sbr.rel (%p1416) target = $region68
        $region67: #{_intermodal_triplet_forward.1} parent=63 // pred_region
          %p1419 = scmp.lt.s32.totalorder %s26, 1
          %s1420 = scalar_select %p1419, %s26, 1
          %p1421 = scmp.lt.s32.totalorder %s27, 0
          %s1422 = scalar_select %p1421, %s27, 0
          %s1423 = sadd.s32 %s1422, %s1420
          %s1424 = smul.addr %s1423, 8
          %s1425 = scalar_lea.vmem %s8, %s1424
        $region68: #{_intermodal_triplet_forward.1} parent=63 // pred_fallthru
          _
      $region64: #{_intermodal_triplet_forward.1} parent=5 // pred_fallthru
        _
    $region6: #{_intermodal_triplet_forward.1} parent=1 // loop_footer
      %s19 = sadd.s32 1, %s15
    $region7: #{_intermodal_triplet_forward.1} parent=1 // loop_footer_branch
      %14 = sbr.rel target = $region3
    $region8: #{_intermodal_triplet_forward.1} parent=1 // loop_exit
      _
    %1426 = vsyncpa [#allocation3], 1
    %s1427 = scalar_lea.sflag [#allocation3], 1
    %1428 = vsyncpa %s1427, 1

</llo_original>
